<compile_context>
chip_gen: v7x
topology: tpu7x:2x2x1
jax: 0.10.0
libtpu: 0.0.40
codegen_flags: <defaults>
</compile_context>

<pallas_src>
import jax
import jax.numpy as jnp
from jax.experimental import pallas as pl
from jax.experimental.pallas import tpu as pltpu

_H1 = 400        # l1 / l4 width
_H1_PAD = 1024   # fused l1+l4 output width: heads at lane-aligned cols 0 and 512
_H2 = 300        # l2 / l5 width


def _ensemble_critic_kernel(sa_ref, w14_ref, w25_ref, b25_ref, w36_ref, b36_ref,
                            out_ref):
    # sa_ref: (TB, D+1) f32; last column is the constant 1 (bias column).
    x = sa_ref[...].astype(jnp.bfloat16)

    # Fused l1/l4 (+ biases folded into the last weight row): one MXU pass.
    hg = jnp.dot(x, w14_ref[...], preferred_element_type=jnp.float32)  # (TB,1024) f32
    hg = jnp.maximum(hg, 0.0)
    h = hg[:, 0:_H1]          # head-1 activations (aligned slice start @ 0)
    g = hg[:, 512:512 + _H1]  # head-2 activations (aligned slice start @ 512)

    # l2 / l5: bf16 MXU operands, f32 accumulation; bias + ReLU in f32.
    h2 = jnp.dot(h.astype(jnp.bfloat16), w25_ref[0],
                 preferred_element_type=jnp.float32) + b25_ref[0]
    h2 = jnp.maximum(h2, 0.0)
    g2 = jnp.dot(g.astype(jnp.bfloat16), w25_ref[1],
                 preferred_element_type=jnp.float32) + b25_ref[1]
    g2 = jnp.maximum(g2, 0.0)

    # l3 / l6 (out_features == 1): VPU multiply + lane reduction, all f32.
    q1 = jnp.sum(h2 * w36_ref[0:1, :], axis=-1, keepdims=True) + b36_ref[:, 0:1]
    q2 = jnp.sum(g2 * w36_ref[1:2, :], axis=-1, keepdims=True) + b36_ref[:, 1:2]

    # Population std over the 2-member ensemble (torch std(..., unbiased=False)).
    std = 0.5 * jnp.abs(q1 - q2)

    out_ref[...] = jnp.concatenate([q1, q2, std], axis=-1)  # (TB, 3), one store


def init_params(key, state_dim, action_dim):
    """Synthetic params mirroring the module's shapes, stored (in, out)."""
    in_dim = state_dim + action_dim
    dims = [
        (in_dim, _H1), (_H1, _H2), (_H2, 1),   # l1, l2, l3
        (in_dim, _H1), (_H1, _H2), (_H2, 1),   # l4, l5, l6
    ]
    params = []
    for (fan_in, fan_out) in dims:
        key, kw, kb = jax.random.split(key, 3)
        bound = 1.0 / jnp.sqrt(fan_in)
        w = jax.random.uniform(kw, (fan_in, fan_out), jnp.float32, -bound, bound)
        b = jax.random.uniform(kb, (1, fan_out), jnp.float32, -bound, bound)
        params += [w, b]
    return tuple(params)


def pack_params(params):
    """Pack the 12 Linear params into the 6 kernel arrays (do once, off hot path)."""
    (w1, b1, w2, b2, w3, b3, w4, b4, w5, b5, w6, b6) = params
    d = w1.shape[0]
    w14 = jnp.zeros((d + 1, _H1_PAD), jnp.float32)
    w14 = w14.at[:d, 0:_H1].set(w1).at[d, 0:_H1].set(b1[0])
    w14 = w14.at[:d, 512:512 + _H1].set(w4).at[d, 512:512 + _H1].set(b4[0])
    w14 = w14.astype(jnp.bfloat16)                            # (D+1, 1024) bf16
    w25 = jnp.stack([w2, w5], axis=0).astype(jnp.bfloat16)    # (2, 400, 300) bf16
    b25 = jnp.stack([b2, b5], axis=0)                         # (2, 1, 300)  f32
    w36 = jnp.stack([w3[:, 0], w6[:, 0]], axis=0)             # (2, 300)     f32
    b36 = jnp.concatenate([b3, b6], axis=1)                   # (1, 2)       f32
    return w14, w25, b25, w36, b36


def ensemble_critic_forward(state, action, packed_params, with_var=False, *,
                            batch_tile=512):
    """Pallas implementation of EnsembleCritic.forward.

    Returns all_qs of shape (2, B, 1); if with_var, also std over the ensemble
    axis (population std, unbiased=False) of shape (B, 1).
    """
    w14, w25, b25, w36, b36 = packed_params
    B = state.shape[0]
    ones = jnp.ones((B, 1), jnp.float32)
    sa1 = jnp.concatenate(
        [state.astype(jnp.float32), action.astype(jnp.float32), ones], axis=1)
    din = sa1.shape[1]
    assert w14.shape[0] == din, "packed params do not match state/action dims"

    tb = B if B <= batch_tile else batch_tile     # full batch for small B
    grid = (pl.cdiv(B, tb),)

    in_specs = [
        pl.BlockSpec((tb, din), lambda i: (i, 0)),        # input tile: streamed
        pl.BlockSpec(w14.shape, lambda i: (0, 0)),        # weights: resident
        pl.BlockSpec(w25.shape, lambda i: (0, 0, 0)),
        pl.BlockSpec(b25.shape, lambda i: (0, 0, 0)),
        pl.BlockSpec(w36.shape, lambda i: (0, 0)),
        pl.BlockSpec(b36.shape, lambda i: (0, 0)),
    ]
    out_specs = pl.BlockSpec((tb, 3), lambda i: (i, 0))

    in_arrays = (sa1, w14, w25, b25, w36, b36)
    flops = 2 * B * (din * _H1_PAD + 2 * _H1 * _H2 + 2 * _H2)
    bytes_accessed = (sum(int(a.size) * a.dtype.itemsize for a in in_arrays)
                      + B * 3 * 4)

    out = pl.pallas_call(
        _ensemble_critic_kernel,
        out_shape=jax.ShapeDtypeStruct((B, 3), jnp.float32),
        grid_spec=pltpu.PrefetchScalarGridSpec(
            num_scalar_prefetch=0,
            grid=grid,
            in_specs=in_specs,
            out_specs=out_specs,
        ),
        compiler_params=pltpu.CompilerParams(
            dimension_semantics=("parallel",),
        ),
        cost_estimate=pl.CostEstimate(
            flops=int(flops), transcendentals=0,
            bytes_accessed=int(bytes_accessed)),
    )(*in_arrays)

    all_qs = jnp.transpose(out[:, 0:2]).reshape(2, B, 1)
    if with_var:
        return all_qs, out[:, 2:3]
    return all_qs


def _reference_forward(state, action, params):
    """Pure-JAX f32 reference matching the PyTorch module."""
    (w1, b1, w2, b2, w3, b3, w4, b4, w5, b5, w6, b6) = params
    sa = jnp.concatenate([state, action], axis=1)
    h = jnp.maximum(sa @ w1 + b1, 0.0)
    h = jnp.maximum(h @ w2 + b2, 0.0)
    q1 = h @ w3 + b3
    g = jnp.maximum(sa @ w4 + b4, 0.0)
    g = jnp.maximum(g @ w5 + b5, 0.0)
    q2 = g @ w6 + b6
    return jnp.stack([q1, q2], axis=0)


if __name__ == "__main__":
    key = jax.random.PRNGKey(0)
    batch, state_dim, action_dim = 8, 11, 3

    kp, ks, ka = jax.random.split(key, 3)
    params = init_params(kp, state_dim, action_dim)
    packed = pack_params(params)
    state = jax.random.normal(ks, (batch, state_dim), jnp.float32)
    action = jax.random.normal(ka, (batch, action_dim), jnp.float32)

    all_qs, std_q = ensemble_critic_forward(state, action, packed, with_var=True)
    all_qs = jax.block_until_ready(all_qs)
    std_q = jax.block_until_ready(std_q)

    ref = _reference_forward(state, action, params)
    ref_std = jnp.std(ref, axis=0, ddof=0)  # module uses unbiased=False

    assert all_qs.shape == (2, batch, 1)
    assert std_q.shape == (batch, 1)
    # bf16 MXU operands (f32 accumulation) -> tolerance loosened vs the pure
    # f32 reference; observed error is O(1e-3) on O(0.1) magnitudes.
    assert jnp.allclose(all_qs, ref, atol=2e-2, rtol=2e-2), (
        float(jnp.max(jnp.abs(all_qs - ref))))
    assert jnp.allclose(std_q, ref_std, atol=2e-2, rtol=2e-2), (
        float(jnp.max(jnp.abs(std_q - ref_std))))

    print("KERNEL_OK")
</pallas_src>

<mosaic_0001>
module attributes {stable_mosaic.version = 11 : i64} {
  func.func @_ensemble_critic_kernel(%arg0: i32, %arg1: memref<8x15xf32, #tpu.memory_space<vmem>>, %arg2: memref<15x1024xbf16, #tpu.memory_space<vmem>>, %arg3: memref<2x400x300xbf16, #tpu.memory_space<vmem>>, %arg4: memref<2x1x300xf32, #tpu.memory_space<vmem>>, %arg5: memref<2x300xf32, #tpu.memory_space<vmem>>, %arg6: memref<1x2xf32, #tpu.memory_space<vmem>>, %arg7: memref<8x3xf32, #tpu.memory_space<vmem>>) attributes {dimension_semantics = [#tpu.dimension_semantics<parallel>], iteration_bounds = array<i64: 1>, scalar_prefetch = 0 : i64, scratch_operands = 0 : i64, tpu.core_type = #tpu.core_type<tc>, window_params = [{transform_indices = @transform_0, window_bounds = array<i64: 8, 15>}, {pipeline_mode = #tpu.pipeline_mode<synchronous>, transform_indices = @transform_1, window_bounds = array<i64: 15, 1024>}, {pipeline_mode = #tpu.pipeline_mode<synchronous>, transform_indices = @transform_2, window_bounds = array<i64: 2, 400, 300>}, {pipeline_mode = #tpu.pipeline_mode<synchronous>, transform_indices = @transform_3, window_bounds = array<i64: 2, 1, 300>}, {pipeline_mode = #tpu.pipeline_mode<synchronous>, transform_indices = @transform_4, window_bounds = array<i64: 2, 300>}, {pipeline_mode = #tpu.pipeline_mode<synchronous>, transform_indices = @transform_5, window_bounds = array<i64: 1, 2>}, {transform_indices = @transform_6, window_bounds = array<i64: 8, 3>}]} {
    %c0 = arith.constant 0 : index
    %c0_0 = arith.constant 0 : index
    %0 = vector.load %arg1[%c0, %c0_0] : memref<8x15xf32, #tpu.memory_space<vmem>>, vector<8x15xf32>
    %1 = arith.truncf %0 : vector<8x15xf32> to vector<8x15xbf16>
    %c0_1 = arith.constant 0 : index
    %c0_2 = arith.constant 0 : index
    %2 = vector.load %arg2[%c0_1, %c0_2] : memref<15x1024xbf16, #tpu.memory_space<vmem>>, vector<15x1024xbf16>
    %cst = arith.constant dense<0.000000e+00> : vector<8x1024xf32>
    %3 = tpu.matmul %1, %2, %cst {dimension_numbers = #tpu.dot_dimension_numbers<[1], [0], [0], [1], [0, 0, 1, 1], [], []>} : vector<8x15xbf16>, vector<15x1024xbf16>, vector<8x1024xf32> -> vector<8x1024xf32>
    %cst_3 = arith.constant 0.000000e+00 : f32
    %4 = vector.broadcast %cst_3 : f32 to vector<8x1024xf32>
    %5 = arith.maximumf %3, %4 : vector<8x1024xf32>
    %6 = vector.extract_strided_slice %5 {offsets = [0, 0], sizes = [8, 400], strides = [1, 1]} : vector<8x1024xf32> to vector<8x400xf32>
    %7 = vector.extract_strided_slice %5 {offsets = [0, 512], sizes = [8, 400], strides = [1, 1]} : vector<8x1024xf32> to vector<8x400xf32>
    %8 = arith.truncf %6 : vector<8x400xf32> to vector<8x400xbf16>
    %c0_4 = arith.constant 0 : index
    %c0_5 = arith.constant 0 : index
    %c0_6 = arith.constant 0 : index
    %9 = vector.load %arg3[%c0_4, %c0_5, %c0_6] : memref<2x400x300xbf16, #tpu.memory_space<vmem>>, vector<1x400x300xbf16>
    %10 = vector.shape_cast %9 : vector<1x400x300xbf16> to vector<400x300xbf16>
    %cst_7 = arith.constant dense<0.000000e+00> : vector<8x300xf32>
    %11 = tpu.matmul %8, %10, %cst_7 {dimension_numbers = #tpu.dot_dimension_numbers<[1], [0], [0], [1], [0, 0, 1, 1], [], []>} : vector<8x400xbf16>, vector<400x300xbf16>, vector<8x300xf32> -> vector<8x300xf32>
    %c0_8 = arith.constant 0 : index
    %c0_9 = arith.constant 0 : index
    %c0_10 = arith.constant 0 : index
    %12 = vector.load %arg4[%c0_8, %c0_9, %c0_10] : memref<2x1x300xf32, #tpu.memory_space<vmem>>, vector<1x1x300xf32>
    %13 = vector.shape_cast %12 : vector<1x1x300xf32> to vector<1x300xf32>
    %14 = vector.broadcast %13 : vector<1x300xf32> to vector<8x300xf32>
    %15 = arith.addf %11, %14 : vector<8x300xf32>
    %cst_11 = arith.constant 0.000000e+00 : f32
    %16 = vector.broadcast %cst_11 : f32 to vector<8x300xf32>
    %17 = arith.maximumf %15, %16 : vector<8x300xf32>
    %18 = arith.truncf %7 : vector<8x400xf32> to vector<8x400xbf16>
    %c1 = arith.constant 1 : index
    %c0_12 = arith.constant 0 : index
    %c0_13 = arith.constant 0 : index
    %19 = vector.load %arg3[%c1, %c0_12, %c0_13] : memref<2x400x300xbf16, #tpu.memory_space<vmem>>, vector<1x400x300xbf16>
    %20 = vector.shape_cast %19 : vector<1x400x300xbf16> to vector<400x300xbf16>
    %cst_14 = arith.constant dense<0.000000e+00> : vector<8x300xf32>
    %21 = tpu.matmul %18, %20, %cst_14 {dimension_numbers = #tpu.dot_dimension_numbers<[1], [0], [0], [1], [0, 0, 1, 1], [], []>} : vector<8x400xbf16>, vector<400x300xbf16>, vector<8x300xf32> -> vector<8x300xf32>
    %c1_15 = arith.constant 1 : index
    %c0_16 = arith.constant 0 : index
    %c0_17 = arith.constant 0 : index
    %22 = vector.load %arg4[%c1_15, %c0_16, %c0_17] : memref<2x1x300xf32, #tpu.memory_space<vmem>>, vector<1x1x300xf32>
    %23 = vector.shape_cast %22 : vector<1x1x300xf32> to vector<1x300xf32>
    %24 = vector.broadcast %23 : vector<1x300xf32> to vector<8x300xf32>
    %25 = arith.addf %21, %24 : vector<8x300xf32>
    %cst_18 = arith.constant 0.000000e+00 : f32
    %26 = vector.broadcast %cst_18 : f32 to vector<8x300xf32>
    %27 = arith.maximumf %25, %26 : vector<8x300xf32>
    %c0_19 = arith.constant 0 : index
    %c0_20 = arith.constant 0 : index
    %28 = vector.load %arg5[%c0_19, %c0_20] : memref<2x300xf32, #tpu.memory_space<vmem>>, vector<1x300xf32>
    %29 = vector.broadcast %28 : vector<1x300xf32> to vector<8x300xf32>
    %30 = arith.mulf %17, %29 : vector<8x300xf32>
    %cst_21 = arith.constant dense<0.000000e+00> : vector<8xf32>
    %31 = vector.multi_reduction <add>, %30, %cst_21 [1] : vector<8x300xf32> to vector<8xf32>
    %32 = vector.shape_cast %31 : vector<8xf32> to vector<8x1xf32>
    %c0_22 = arith.constant 0 : index
    %c0_23 = arith.constant 0 : index
    %33 = vector.load %arg6[%c0_22, %c0_23] : memref<1x2xf32, #tpu.memory_space<vmem>>, vector<1x1xf32>
    %34 = vector.broadcast %33 : vector<1x1xf32> to vector<8x1xf32>
    %35 = arith.addf %32, %34 : vector<8x1xf32>
    %c1_24 = arith.constant 1 : index
    %c0_25 = arith.constant 0 : index
    %36 = vector.load %arg5[%c1_24, %c0_25] : memref<2x300xf32, #tpu.memory_space<vmem>>, vector<1x300xf32>
    %37 = vector.broadcast %36 : vector<1x300xf32> to vector<8x300xf32>
    %38 = arith.mulf %27, %37 : vector<8x300xf32>
    %cst_26 = arith.constant dense<0.000000e+00> : vector<8xf32>
    %39 = vector.multi_reduction <add>, %38, %cst_26 [1] : vector<8x300xf32> to vector<8xf32>
    %40 = vector.shape_cast %39 : vector<8xf32> to vector<8x1xf32>
    %c0_27 = arith.constant 0 : index
    %c1_28 = arith.constant 1 : index
    %41 = vector.load %arg6[%c0_27, %c1_28] : memref<1x2xf32, #tpu.memory_space<vmem>>, vector<1x1xf32>
    %42 = vector.broadcast %41 : vector<1x1xf32> to vector<8x1xf32>
    %43 = arith.addf %40, %42 : vector<8x1xf32>
    %44 = arith.subf %35, %43 : vector<8x1xf32>
    %45 = math.absf %44 : vector<8x1xf32>
    %cst_29 = arith.constant 5.000000e-01 : f32
    %46 = vector.broadcast %cst_29 : f32 to vector<8x1xf32>
    %47 = arith.mulf %46, %45 : vector<8x1xf32>
    %48 = tpu.concatenate %35, %43, %47 in 1 : vector<8x1xf32>, vector<8x1xf32>, vector<8x1xf32> -> vector<8x3xf32>
    %c0_30 = arith.constant 0 : index
    %c0_31 = arith.constant 0 : index
    %49 = vector.load %arg7[%c0_30, %c0_31] : memref<8x3xf32, #tpu.memory_space<vmem>>, vector<8x3xf32>
    tpu.vector_store %arg7[%c0_30, %c0_31], %48 {strides = array<i32>} : memref<8x3xf32, #tpu.memory_space<vmem>>, vector<8x3xf32>,
    return
  }
  func.func @transform_0(%arg0: i32) -> (i32, i32) {
    %c0_i32 = arith.constant 0 : i32
    %c0_i32_0 = arith.constant 0 : i32
    return %arg0, %c0_i32 : i32, i32
  }
  func.func @transform_1(%arg0: i32) -> (i32, i32) {
    %c0_i32 = arith.constant 0 : i32
    %c0_i32_0 = arith.constant 0 : i32
    %c0_i32_1 = arith.constant 0 : i32
    return %c0_i32, %c0_i32_0 : i32, i32
  }
  func.func @transform_2(%arg0: i32) -> (i32, i32, i32) {
    %c0_i32 = arith.constant 0 : i32
    %c0_i32_0 = arith.constant 0 : i32
    %c0_i32_1 = arith.constant 0 : i32
    %c0_i32_2 = arith.constant 0 : i32
    return %c0_i32, %c0_i32_0, %c0_i32_1 : i32, i32, i32
  }
  func.func @transform_3(%arg0: i32) -> (i32, i32, i32) {
    %c0_i32 = arith.constant 0 : i32
    %c0_i32_0 = arith.constant 0 : i32
    %c0_i32_1 = arith.constant 0 : i32
    %c0_i32_2 = arith.constant 0 : i32
    return %c0_i32, %c0_i32_0, %c0_i32_1 : i32, i32, i32
  }
  func.func @transform_4(%arg0: i32) -> (i32, i32) {
    %c0_i32 = arith.constant 0 : i32
    %c0_i32_0 = arith.constant 0 : i32
    %c0_i32_1 = arith.constant 0 : i32
    return %c0_i32, %c0_i32_0 : i32, i32
  }
  func.func @transform_5(%arg0: i32) -> (i32, i32) {
    %c0_i32 = arith.constant 0 : i32
    %c0_i32_0 = arith.constant 0 : i32
    %c0_i32_1 = arith.constant 0 : i32
    return %c0_i32, %c0_i32_0 : i32, i32
  }
  func.func @transform_6(%arg0: i32) -> (i32, i32) {
    %c0_i32 = arith.constant 0 : i32
    %c0_i32_0 = arith.constant 0 : i32
    return %arg0, %c0_i32 : i32, i32
  }
}

</mosaic_0001>

<llo_original>
// kernel: tpu_custom_call.1
$region0: #{tpu_custom_call.1}
  #allocation0 [shape = 'u32[]', space=smem, size = 0x4, offset = 0x4, fixed_abs, tag = 'smem constant byte address 0x4 - core index']
  #allocation1 [shape = 'u32[144,128]{1,0:T(1,128)}', space=vmem, size = 0x12000, scoped, tag = 'internal scratch']
  %s0 = inlined_call_operand.hbm [shape: f32[8,15], index: 0, kind: input, shape index: {}]
  %s1 = inlined_call_operand.hbm [shape: bf16[15,1024], index: 1, kind: input, shape index: {}]
  %s2 = inlined_call_operand.hbm [shape: bf16[2,400,300], index: 2, kind: input, shape index: {}]
  %s3 = inlined_call_operand.vmem [shape: f32[2,1,300], index: 3, kind: input, shape index: {}]
  %s4 = inlined_call_operand.vmem [shape: f32[2,300], index: 4, kind: input, shape index: {}]
  %s5 = inlined_call_operand.vmem [shape: f32[1,2], index: 5, kind: input, shape index: {}]
  %s6 = inlined_call_operand.vmem [shape: f32[8,3], index: 6, kind: output, shape index: {}]
  %s7 = sld [smem:[#allocation0]]
  $region46: #{tpu_custom_call.1} parent=0
    _
  %s9 = ssub.s32 1, %s7
  %s10 = scalar_select 0, %s9, %s7
  $region1: #{tpu_custom_call.1} parent=0
    #allocation2 [shape = 'u8[4096]{0}', space=vmem, size = 0x1000, scoped, tag = 'input window, operand 0, single buffered']
    #allocation3 [shape = 's32[1]{0}', space=sflag, size = 0x4, scoped, tag = 'scoped memory for tpu_custom_call.1']
    #allocation4 [shape = 'u8[32768]{0}', space=vmem, size = 0x8000, scoped, tag = 'input window, operand 1, single buffered']
    #allocation5 [shape = 's32[1]{0}', space=sflag, size = 0x4, scoped, tag = 'scoped memory for tpu_custom_call.1']
    #allocation6 [shape = 'u8[614400]{0}', space=vmem, size = 0x96000, scoped, tag = 'input window, operand 2, single buffered']
    %11 = vsyncpa [#allocation3], 0
    %12 = vsyncpa [#allocation5], 0
    // Predicated region
    $region2: #{tpu_custom_call.1} parent=1 // pred_check
      _
    $region3: #{tpu_custom_call.1} parent=1 // pred_check_branch
      %14 = sbr.rel (0) target = $region5
    $region4: #{tpu_custom_call.1} parent=1 // pred_region
      %s16 = ssub.s32 128, 128
      %17 = vsyncadd [#allocation3], %s16
      %s19 = sshll.u32 [#allocation2], 4
      %s20 = int_to_ptr.vmem [resolvable:$true] %s19
      %22 = dma.hbm_to_vmem [thread:$0]  %s0, 128, %s20, [#allocation3]
    $region5: #{tpu_custom_call.1} parent=1 // pred_fallthru
      _
    // Predicated region
    $region6: #{tpu_custom_call.1} parent=1 // pred_check
      _
    $region7: #{tpu_custom_call.1} parent=1 // pred_check_branch
      %24 = sbr.rel (0) target = $region9
    $region8: #{tpu_custom_call.1} parent=1 // pred_region
      %s26 = ssub.s32 1024, 1024
      %27 = vsyncadd [#allocation5], %s26
      %s28 = sshll.u32 [#allocation4], 4
      %s29 = int_to_ptr.vmem [resolvable:$true] %s28
      %34 = dma.hbm_to_vmem [thread:$0]  %s1, 1024, %s29, [#allocation5], 512, 512, 32
    $region9: #{tpu_custom_call.1} parent=1 // pred_fallthru
      _
    // Predicated region
    $region10: #{tpu_custom_call.1} parent=1 // pred_check
      _
    $region11: #{tpu_custom_call.1} parent=1 // pred_check_branch
      %36 = sbr.rel (0) target = $region13
    $region12: #{tpu_custom_call.1} parent=1 // pred_region
      %s38 = ssub.s32 19200, 19200
      %39 = vsyncadd [#allocation5], %s38
      %s40 = sshll.u32 [#allocation6], 4
      %s41 = int_to_ptr.vmem [resolvable:$true] %s40
      %46 = dma.hbm_to_vmem [thread:$0]  %s2, 19200, %s41, [#allocation5], 192, 192, 12
    $region13: #{tpu_custom_call.1} parent=1 // pred_fallthru
      _
    // Predicated region
    $region14: #{tpu_custom_call.1} parent=1 // pred_check
      _
    $region15: #{tpu_custom_call.1} parent=1 // pred_check_branch
      %48 = sbr.rel (0) target = $region17
    $region16: #{tpu_custom_call.1} parent=1 // pred_region
      _
    $region17: #{tpu_custom_call.1} parent=1 // pred_fallthru
      _
    // Predicated region
    $region18: #{tpu_custom_call.1} parent=1 // pred_check
      _
    $region19: #{tpu_custom_call.1} parent=1 // pred_check_branch
      %50 = sbr.rel (0) target = $region21
    $region20: #{tpu_custom_call.1} parent=1 // pred_region
      _
    $region21: #{tpu_custom_call.1} parent=1 // pred_fallthru
      _
    // Predicated region
    $region22: #{tpu_custom_call.1} parent=1 // pred_check
      _
    $region23: #{tpu_custom_call.1} parent=1 // pred_check_branch
      %52 = sbr.rel (0) target = $region25
    $region24: #{tpu_custom_call.1} parent=1 // pred_region
      _
    $region25: #{tpu_custom_call.1} parent=1 // pred_fallthru
      _
    // Predicated region
    $region26: #{tpu_custom_call.1} parent=1 // pred_check
      _
    $region27: #{tpu_custom_call.1} parent=1 // pred_check_branch
      %54 = sbr.rel (0) target = $region29
    $region28: #{tpu_custom_call.1} parent=1 // pred_region
      %55 = dma.done [#allocation3], 128
    $region29: #{tpu_custom_call.1} parent=1 // pred_fallthru
      _
    // Predicated region
    $region30: #{tpu_custom_call.1} parent=1 // pred_check
      _
    $region31: #{tpu_custom_call.1} parent=1 // pred_check_branch
      %57 = sbr.rel (0) target = $region33
    $region32: #{tpu_custom_call.1} parent=1 // pred_region
      %58 = dma.done [#allocation5], 1024
    $region33: #{tpu_custom_call.1} parent=1 // pred_fallthru
      _
    // Predicated region
    $region34: #{tpu_custom_call.1} parent=1 // pred_check
      _
    $region35: #{tpu_custom_call.1} parent=1 // pred_check_branch
      %60 = sbr.rel (0) target = $region37
    $region36: #{tpu_custom_call.1} parent=1 // pred_region
      %61 = dma.done [#allocation5], 19200
    $region37: #{tpu_custom_call.1} parent=1 // pred_fallthru
      _
    %v63 = vld [vmem:[#allocation2] sm:$0xff]
    %v64 = vpack.c.bf16 %v63, %v63
    %v65 = vld [vmem:[#allocation4] sm:$0xff]
    %v66 = vld [vmem:[#allocation4 + $0x8] sm:$0xff]
    %v67 = vld [vmem:[#allocation4 + $0x10] sm:$0xff]
    %v68 = vld [vmem:[#allocation4 + $0x18] sm:$0xff]
    %v69 = vld [vmem:[#allocation4 + $0x20] sm:$0xff]
    %v70 = vld [vmem:[#allocation4 + $0x28] sm:$0xff]
    %v71 = vld [vmem:[#allocation4 + $0x30] sm:$0xff]
    %v72 = vld [vmem:[#allocation4 + $0x38] sm:$0xff]
    %v81 = vunpack.c.l.b16 %v65
    %v82 = vunpack.c.h.b16 %v65
    %v83 = vunpack.c.l.b16 %v66
    %v84 = vunpack.c.h.b16 %v66
    %v85 = vunpack.c.l.b16 %v67
    %v86 = vunpack.c.h.b16 %v67
    %v87 = vunpack.c.l.b16 %v68
    %v88 = vunpack.c.h.b16 %v68
    %v89 = vunpack.c.l.b16 %v69
    %v90 = vunpack.c.h.b16 %v69
    %v91 = vunpack.c.l.b16 %v70
    %v92 = vunpack.c.h.b16 %v70
    %v93 = vunpack.c.l.b16 %v71
    %v94 = vunpack.c.h.b16 %v71
    %v95 = vunpack.c.l.b16 %v72
    %v96 = vunpack.c.h.b16 %v72
    %v97 = vpack.c.b16 %v89, %v81
    %v98 = vpack.c.b16 %v90, %v82
    %v99 = vpack.c.b16 %v91, %v83
    %v100 = vpack.c.b16 %v92, %v84
    %v101 = vpack.c.b16 %v93, %v85
    %v102 = vpack.c.b16 %v94, %v86
    %v103 = vpack.c.b16 %v95, %v87
    %v104 = vpack.c.b16 %v96, %v88
    %vm105 = vcmask 121856
    %v107 = vsel %vm105, %v64, 0
    %vm109 = vcmask 1046528
    %vm110 = vcmask 1047552
    %v111 = vsel %vm109, 4294967295, 65535
    %v112 = vsel %vm110, %v111, 0
    %v114 = vand.u32 %v97, %v112
    %v117 = vand.u32 %v98, %v112
    %v120 = vand.u32 %v99, %v112
    %v123 = vand.u32 %v100, %v112
    %v126 = vand.u32 %v101, %v112
    %v129 = vand.u32 %v102, %v112
    %v132 = vand.u32 %v103, %v112
    %v135 = vand.u32 %v104, %v112
    %137 = vmatprep.subr.bf16.mxu0 %v117
    %138 = vmatpush1.bf16.msra.mxu0 %v114
    %139 = vmatprep.subr.bf16.mxu0 0
    %140 = vmatpush1.bf16.msra.mxu0 0
    %141 = vmatprep.subr.bf16.mxu0 0
    %142 = vmatpush1.bf16.msra.mxu0 0
    %143 = vmatprep.subr.bf16.mxu0 0
    %144 = vmatpush1.bf16.msra.mxu0 0
    %145 = vmatprep.subr.bf16.mxu0 0
    %146 = vmatpush1.bf16.msra.mxu0 0
    %147 = vmatprep.subr.bf16.mxu0 0
    %148 = vmatpush1.bf16.msra.mxu0 0
    %149 = vmatprep.subr.bf16.mxu0 0
    %150 = vmatpush1.bf16.msra.mxu0 0
    %151 = vmatprep.subr.bf16.mxu0 0
    %152 = vmatpush1.bf16.msra.mxu0 0
    %153 = vmatprep.subr.bf16.mxu0 0
    %154 = vmatpush1.bf16.msra.mxu0 0
    %155 = vmatprep.subr.bf16.mxu0 0
    %156 = vmatpush1.bf16.msra.mxu0 0
    %157 = vmatprep.subr.bf16.mxu0 0
    %158 = vmatpush1.bf16.msra.mxu0 0
    %159 = vmatprep.subr.bf16.mxu0 0
    %160 = vmatpush1.bf16.msra.mxu0 0
    %161 = vmatprep.subr.bf16.mxu0 0
    %162 = vmatpush1.bf16.msra.mxu0 0
    %163 = vmatprep.subr.bf16.mxu0 0
    %164 = vmatpush1.bf16.msra.mxu0 0
    %165 = vmatprep.subr.bf16.mxu0 0
    %166 = vmatpush1.bf16.msra.mxu0 0
    %167 = vmatprep.subr.bf16.mxu0 0
    %168 = vmatpush1.bf16.msra.mxu0 0
    %169 = vmatprep.mubr.bf16.mxu0 0
    %170 = vmatmul.mubr.bf16.gmra.mrb[0].mxu0 %v107
    %v171 = vpop.f32.mrb[0].mxu0
    %v172 = vadd.f32 0.0, %v171
    %v173 = vpop.f32.mrb[0].mxu0
    %v174 = vadd.f32 0.0, %v173
    %v175 = vpop.f32.mrb[0].mxu0
    %v176 = vpop.f32.mrb[0].mxu0
    %177 = vdwg.mxu0
    %178 = vmatprep.subr.bf16.mxu0 %v123
    %179 = vmatpush1.bf16.msra.mxu0 %v120
    %180 = vmatprep.subr.bf16.mxu0 0
    %181 = vmatpush1.bf16.msra.mxu0 0
    %182 = vmatprep.subr.bf16.mxu0 0
    %183 = vmatpush1.bf16.msra.mxu0 0
    %184 = vmatprep.subr.bf16.mxu0 0
    %185 = vmatpush1.bf16.msra.mxu0 0
    %186 = vmatprep.subr.bf16.mxu0 0
    %187 = vmatpush1.bf16.msra.mxu0 0
    %188 = vmatprep.subr.bf16.mxu0 0
    %189 = vmatpush1.bf16.msra.mxu0 0
    %190 = vmatprep.subr.bf16.mxu0 0
    %191 = vmatpush1.bf16.msra.mxu0 0
    %192 = vmatprep.subr.bf16.mxu0 0
    %193 = vmatpush1.bf16.msra.mxu0 0
    %194 = vmatprep.subr.bf16.mxu0 0
    %195 = vmatpush1.bf16.msra.mxu0 0
    %196 = vmatprep.subr.bf16.mxu0 0
    %197 = vmatpush1.bf16.msra.mxu0 0
    %198 = vmatprep.subr.bf16.mxu0 0
    %199 = vmatpush1.bf16.msra.mxu0 0
    %200 = vmatprep.subr.bf16.mxu0 0
    %201 = vmatpush1.bf16.msra.mxu0 0
    %202 = vmatprep.subr.bf16.mxu0 0
    %203 = vmatpush1.bf16.msra.mxu0 0
    %204 = vmatprep.subr.bf16.mxu0 0
    %205 = vmatpush1.bf16.msra.mxu0 0
    %206 = vmatprep.subr.bf16.mxu0 0
    %207 = vmatpush1.bf16.msra.mxu0 0
    %208 = vmatprep.subr.bf16.mxu0 0
    %209 = vmatpush1.bf16.msra.mxu0 0
    %210 = vmatprep.mubr.bf16.mxu0 0
    %211 = vmatmul.mubr.bf16.gmra.mrb[0].mxu0 %v107
    %v212 = vpop.f32.mrb[0].mxu0
    %v213 = vadd.f32 0.0, %v212
    %v214 = vpop.f32.mrb[0].mxu0
    %v215 = vadd.f32 0.0, %v214
    %v216 = vpop.f32.mrb[0].mxu0
    %v217 = vpop.f32.mrb[0].mxu0
    %218 = vdwg.mxu0
    %219 = vmatprep.subr.bf16.mxu0 %v129
    %220 = vmatpush1.bf16.msra.mxu0 %v126
    %221 = vmatprep.subr.bf16.mxu0 0
    %222 = vmatpush1.bf16.msra.mxu0 0
    %223 = vmatprep.subr.bf16.mxu0 0
    %224 = vmatpush1.bf16.msra.mxu0 0
    %225 = vmatprep.subr.bf16.mxu0 0
    %226 = vmatpush1.bf16.msra.mxu0 0
    %227 = vmatprep.subr.bf16.mxu0 0
    %228 = vmatpush1.bf16.msra.mxu0 0
    %229 = vmatprep.subr.bf16.mxu0 0
    %230 = vmatpush1.bf16.msra.mxu0 0
    %231 = vmatprep.subr.bf16.mxu0 0
    %232 = vmatpush1.bf16.msra.mxu0 0
    %233 = vmatprep.subr.bf16.mxu0 0
    %234 = vmatpush1.bf16.msra.mxu0 0
    %235 = vmatprep.subr.bf16.mxu0 0
    %236 = vmatpush1.bf16.msra.mxu0 0
    %237 = vmatprep.subr.bf16.mxu0 0
    %238 = vmatpush1.bf16.msra.mxu0 0
    %239 = vmatprep.subr.bf16.mxu0 0
    %240 = vmatpush1.bf16.msra.mxu0 0
    %241 = vmatprep.subr.bf16.mxu0 0
    %242 = vmatpush1.bf16.msra.mxu0 0
    %243 = vmatprep.subr.bf16.mxu0 0
    %244 = vmatpush1.bf16.msra.mxu0 0
    %245 = vmatprep.subr.bf16.mxu0 0
    %246 = vmatpush1.bf16.msra.mxu0 0
    %247 = vmatprep.subr.bf16.mxu0 0
    %248 = vmatpush1.bf16.msra.mxu0 0
    %249 = vmatprep.subr.bf16.mxu0 0
    %250 = vmatpush1.bf16.msra.mxu0 0
    %251 = vmatprep.mubr.bf16.mxu0 0
    %252 = vmatmul.mubr.bf16.gmra.mrb[0].mxu0 %v107
    %v253 = vpop.f32.mrb[0].mxu0
    %v254 = vadd.f32 0.0, %v253
    %v255 = vpop.f32.mrb[0].mxu0
    %v256 = vadd.f32 0.0, %v255
    %v257 = vpop.f32.mrb[0].mxu0
    %v258 = vpop.f32.mrb[0].mxu0
    %259 = vdwg.mxu0
    %260 = vmatprep.subr.bf16.mxu0 %v135
    %261 = vmatpush1.bf16.msra.mxu0 %v132
    %262 = vmatprep.subr.bf16.mxu0 0
    %263 = vmatpush1.bf16.msra.mxu0 0
    %264 = vmatprep.subr.bf16.mxu0 0
    %265 = vmatpush1.bf16.msra.mxu0 0
    %266 = vmatprep.subr.bf16.mxu0 0
    %267 = vmatpush1.bf16.msra.mxu0 0
    %268 = vmatprep.subr.bf16.mxu0 0
    %269 = vmatpush1.bf16.msra.mxu0 0
    %270 = vmatprep.subr.bf16.mxu0 0
    %271 = vmatpush1.bf16.msra.mxu0 0
    %272 = vmatprep.subr.bf16.mxu0 0
    %273 = vmatpush1.bf16.msra.mxu0 0
    %274 = vmatprep.subr.bf16.mxu0 0
    %275 = vmatpush1.bf16.msra.mxu0 0
    %276 = vmatprep.subr.bf16.mxu0 0
    %277 = vmatpush1.bf16.msra.mxu0 0
    %278 = vmatprep.subr.bf16.mxu0 0
    %279 = vmatpush1.bf16.msra.mxu0 0
    %280 = vmatprep.subr.bf16.mxu0 0
    %281 = vmatpush1.bf16.msra.mxu0 0
    %282 = vmatprep.subr.bf16.mxu0 0
    %283 = vmatpush1.bf16.msra.mxu0 0
    %284 = vmatprep.subr.bf16.mxu0 0
    %285 = vmatpush1.bf16.msra.mxu0 0
    %286 = vmatprep.subr.bf16.mxu0 0
    %287 = vmatpush1.bf16.msra.mxu0 0
    %288 = vmatprep.subr.bf16.mxu0 0
    %289 = vmatpush1.bf16.msra.mxu0 0
    %290 = vmatprep.subr.bf16.mxu0 0
    %291 = vmatpush1.bf16.msra.mxu0 0
    %292 = vmatprep.mubr.bf16.mxu0 0
    %293 = vmatmul.mubr.bf16.gmra.mrb[0].mxu0 %v107
    %v294 = vpop.f32.mrb[0].mxu0
    %v295 = vadd.f32 0.0, %v294
    %v296 = vpop.f32.mrb[0].mxu0
    %v297 = vadd.f32 0.0, %v296
    %v298 = vpop.f32.mrb[0].mxu0
    %v299 = vpop.f32.mrb[0].mxu0
    %300 = vdwg.mxu0
    %v301 = vmax.f32 %v172, 0.0
    %v302 = vmax.f32 %v174, 0.0
    %v303 = vmax.f32 %v213, 0.0
    %v304 = vmax.f32 %v215, 0.0
    %v305 = vmax.f32 %v254, 0.0
    %v306 = vmax.f32 %v256, 0.0
    %v307 = vmax.f32 %v295, 0.0
    %v308 = vmax.f32 %v297, 0.0
    %v309 = vpack.c.bf16 %v301, %v301
    %v310 = vpack.c.bf16 %v302, %v302
    %v311 = vpack.c.bf16 %v303, %v303
    %v312 = vpack.c.bf16 %v304, %v304
    %v313 = vld [vmem:[#allocation6] sm:$0xff]
    %v314 = vld [vmem:[#allocation6 + $0x8] sm:$0xf]
    %v315 = vld [vmem:[#allocation6 + $0xc] sm:$0xff]
    %v316 = vld [vmem:[#allocation6 + $0x14] sm:$0xf]
    %v317 = vld [vmem:[#allocation6 + $0x18] sm:$0xff]
    %v318 = vld [vmem:[#allocation6 + $0x20] sm:$0xf]
    %v319 = vld [vmem:[#allocation6 + $0x24] sm:$0xff]
    %v320 = vld [vmem:[#allocation6 + $0x2c] sm:$0xf]
    %v321 = vld [vmem:[#allocation6 + $0x30] sm:$0xff]
    %v322 = vld [vmem:[#allocation6 + $0x38] sm:$0xf]
    %v323 = vld [vmem:[#allocation6 + $0x3c] sm:$0xff]
    %v324 = vld [vmem:[#allocation6 + $0x44] sm:$0xf]
    %v325 = vld [vmem:[#allocation6 + $0x48] sm:$0xff]
    %v326 = vld [vmem:[#allocation6 + $0x50] sm:$0xf]
    %v327 = vld [vmem:[#allocation6 + $0x54] sm:$0xff]
    %v328 = vld [vmem:[#allocation6 + $0x5c] sm:$0xf]
    %v329 = vld [vmem:[#allocation6 + $0x60] sm:$0xff]
    %v330 = vld [vmem:[#allocation6 + $0x68] sm:$0xf]
    %v331 = vld [vmem:[#allocation6 + $0x6c] sm:$0xff]
    %v332 = vld [vmem:[#allocation6 + $0x74] sm:$0xf]
    %v333 = vld [vmem:[#allocation6 + $0x78] sm:$0xff]
    %v334 = vld [vmem:[#allocation6 + $0x80] sm:$0xf]
    %v335 = vld [vmem:[#allocation6 + $0x84] sm:$0xff]
    %v336 = vld [vmem:[#allocation6 + $0x8c] sm:$0xf]
    %v337 = vld [vmem:[#allocation6 + $0x90] sm:$0xff]
    %v338 = vld [vmem:[#allocation6 + $0x98] sm:$0xf]
    %v339 = vld [vmem:[#allocation6 + $0x9c] sm:$0xff]
    %v340 = vld [vmem:[#allocation6 + $0xa4] sm:$0xf]
    %v341 = vld [vmem:[#allocation6 + $0xa8] sm:$0xff]
    %v342 = vld [vmem:[#allocation6 + $0xb0] sm:$0xf]
    %v343 = vld [vmem:[#allocation6 + $0xb4] sm:$0xff]
    %v344 = vld [vmem:[#allocation6 + $0xbc] sm:$0xf]
    %v345 = vld [vmem:[#allocation6 + $0xc0] sm:$0xff]
    %v346 = vld [vmem:[#allocation6 + $0xc8] sm:$0xf]
    %v347 = vld [vmem:[#allocation6 + $0xcc] sm:$0xff]
    %v348 = vld [vmem:[#allocation6 + $0xd4] sm:$0xf]
    %v349 = vld [vmem:[#allocation6 + $0xd8] sm:$0xff]
    %v350 = vld [vmem:[#allocation6 + $0xe0] sm:$0xf]
    %v351 = vld [vmem:[#allocation6 + $0xe4] sm:$0xff]
    %v352 = vld [vmem:[#allocation6 + $0xec] sm:$0xf]
    %v353 = vld [vmem:[#allocation6 + $0xf0] sm:$0xff]
    %v354 = vld [vmem:[#allocation6 + $0xf8] sm:$0xf]
    %v355 = vld [vmem:[#allocation6 + $0xfc] sm:$0xff]
    %v356 = vld [vmem:[#allocation6 + $0x104] sm:$0xf]
    %v357 = vld [vmem:[#allocation6 + $0x108] sm:$0xff]
    %v358 = vld [vmem:[#allocation6 + $0x110] sm:$0xf]
    %v359 = vld [vmem:[#allocation6 + $0x114] sm:$0xff]
    %v360 = vld [vmem:[#allocation6 + $0x11c] sm:$0xf]
    %v361 = vld [vmem:[#allocation6 + $0x120] sm:$0xff]
    %v362 = vld [vmem:[#allocation6 + $0x128] sm:$0xf]
    %v363 = vld [vmem:[#allocation6 + $0x12c] sm:$0xff]
    %v364 = vld [vmem:[#allocation6 + $0x134] sm:$0xf]
    %v365 = vld [vmem:[#allocation6 + $0x138] sm:$0xff]
    %v366 = vld [vmem:[#allocation6 + $0x140] sm:$0xf]
    %v367 = vld [vmem:[#allocation6 + $0x144] sm:$0xff]
    %v368 = vld [vmem:[#allocation6 + $0x14c] sm:$0xf]
    %v369 = vld [vmem:[#allocation6 + $0x150] sm:$0xff]
    %v370 = vld [vmem:[#allocation6 + $0x158] sm:$0xf]
    %v371 = vld [vmem:[#allocation6 + $0x15c] sm:$0xff]
    %v372 = vld [vmem:[#allocation6 + $0x164] sm:$0xf]
    %v373 = vld [vmem:[#allocation6 + $0x168] sm:$0xff]
    %v374 = vld [vmem:[#allocation6 + $0x170] sm:$0xf]
    %v375 = vld [vmem:[#allocation6 + $0x174] sm:$0xff]
    %v376 = vld [vmem:[#allocation6 + $0x17c] sm:$0xf]
    %v377 = vld [vmem:[#allocation6 + $0x180] sm:$0xff]
    %v378 = vld [vmem:[#allocation6 + $0x188] sm:$0xf]
    %v379 = vld [vmem:[#allocation6 + $0x18c] sm:$0xff]
    %v380 = vld [vmem:[#allocation6 + $0x194] sm:$0xf]
    %v381 = vld [vmem:[#allocation6 + $0x198] sm:$0xff]
    %v382 = vld [vmem:[#allocation6 + $0x1a0] sm:$0xf]
    %v383 = vld [vmem:[#allocation6 + $0x1a4] sm:$0xff]
    %v384 = vld [vmem:[#allocation6 + $0x1ac] sm:$0xf]
    %v385 = vld [vmem:[#allocation6 + $0x1b0] sm:$0xff]
    %v386 = vld [vmem:[#allocation6 + $0x1b8] sm:$0xf]
    %v387 = vld [vmem:[#allocation6 + $0x1bc] sm:$0xff]
    %v388 = vld [vmem:[#allocation6 + $0x1c4] sm:$0xf]
    %v389 = vld [vmem:[#allocation6 + $0x1c8] sm:$0xff]
    %v390 = vld [vmem:[#allocation6 + $0x1d0] sm:$0xf]
    %v391 = vld [vmem:[#allocation6 + $0x1d4] sm:$0xff]
    %v392 = vld [vmem:[#allocation6 + $0x1dc] sm:$0xf]
    %v393 = vld [vmem:[#allocation6 + $0x1e0] sm:$0xff]
    %v394 = vld [vmem:[#allocation6 + $0x1e8] sm:$0xf]
    %v395 = vld [vmem:[#allocation6 + $0x1ec] sm:$0xff]
    %v396 = vld [vmem:[#allocation6 + $0x1f4] sm:$0xf]
    %v397 = vld [vmem:[#allocation6 + $0x1f8] sm:$0xff]
    %v398 = vld [vmem:[#allocation6 + $0x200] sm:$0xf]
    %v399 = vld [vmem:[#allocation6 + $0x204] sm:$0xff]
    %v400 = vld [vmem:[#allocation6 + $0x20c] sm:$0xf]
    %v401 = vld [vmem:[#allocation6 + $0x210] sm:$0xff]
    %v402 = vld [vmem:[#allocation6 + $0x218] sm:$0xf]
    %v403 = vld [vmem:[#allocation6 + $0x21c] sm:$0xff]
    %v404 = vld [vmem:[#allocation6 + $0x224] sm:$0xf]
    %v405 = vld [vmem:[#allocation6 + $0x228] sm:$0xff]
    %v406 = vld [vmem:[#allocation6 + $0x230] sm:$0xf]
    %v407 = vld [vmem:[#allocation6 + $0x234] sm:$0xff]
    %v408 = vld [vmem:[#allocation6 + $0x23c] sm:$0xf]
    %v409 = vld [vmem:[#allocation6 + $0x240] sm:$0xff]
    %v410 = vld [vmem:[#allocation6 + $0x248] sm:$0xf]
    %v411 = vld [vmem:[#allocation6 + $0x24c] sm:$0xff]
    %v412 = vld [vmem:[#allocation6 + $0x254] sm:$0xf]
    %v413 = vld [vmem:[%s3] sm:$0x7]
    %v415 = vlaneseq
    %v416 = vshrl.u32 %v415, 7
    %v417 = vsub.s32 0, %v416
    %v418 = vrot.slane %v413, %v417
    %v419 = vlaneseq
    %v420 = vshrl.u32 %v419, 7
    %v421 = vsub.s32 1, %v420
    %v422 = vrot.slane %v413, %v421
    %v423 = vlaneseq
    %v424 = vshrl.u32 %v423, 7
    %v425 = vsub.s32 2, %v424
    %v426 = vrot.slane %v413, %v425
    %v530 = vunpack.c.l.b16 %v313
    %v531 = vunpack.c.h.b16 %v313
    %v532 = vunpack.c.l.b16 %v314
    %v533 = vunpack.c.l.b16 %v315
    %v534 = vunpack.c.h.b16 %v315
    %v535 = vunpack.c.l.b16 %v316
    %v536 = vunpack.c.l.b16 %v317
    %v537 = vunpack.c.h.b16 %v317
    %v538 = vunpack.c.l.b16 %v318
    %v539 = vunpack.c.l.b16 %v319
    %v540 = vunpack.c.h.b16 %v319
    %v541 = vunpack.c.l.b16 %v320
    %v542 = vunpack.c.l.b16 %v321
    %v543 = vunpack.c.h.b16 %v321
    %v544 = vunpack.c.l.b16 %v322
    %v545 = vunpack.c.l.b16 %v323
    %v546 = vunpack.c.h.b16 %v323
    %v547 = vunpack.c.l.b16 %v324
    %v548 = vunpack.c.l.b16 %v325
    %v549 = vunpack.c.h.b16 %v325
    %v550 = vunpack.c.l.b16 %v326
    %v551 = vunpack.c.l.b16 %v327
    %v552 = vunpack.c.h.b16 %v327
    %v553 = vunpack.c.l.b16 %v328
    %v554 = vunpack.c.l.b16 %v329
    %v555 = vunpack.c.h.b16 %v329
    %v556 = vunpack.c.l.b16 %v330
    %v557 = vunpack.c.l.b16 %v331
    %v558 = vunpack.c.h.b16 %v331
    %v559 = vunpack.c.l.b16 %v332
    %v560 = vunpack.c.l.b16 %v333
    %v561 = vunpack.c.h.b16 %v333
    %v562 = vunpack.c.l.b16 %v334
    %v563 = vunpack.c.l.b16 %v335
    %v564 = vunpack.c.h.b16 %v335
    %v565 = vunpack.c.l.b16 %v336
    %v566 = vunpack.c.l.b16 %v337
    %v567 = vunpack.c.h.b16 %v337
    %v568 = vunpack.c.l.b16 %v338
    %v569 = vunpack.c.l.b16 %v339
    %v570 = vunpack.c.h.b16 %v339
    %v571 = vunpack.c.l.b16 %v340
    %v572 = vunpack.c.l.b16 %v341
    %v573 = vunpack.c.h.b16 %v341
    %v574 = vunpack.c.l.b16 %v342
    %v575 = vunpack.c.l.b16 %v343
    %v576 = vunpack.c.h.b16 %v343
    %v577 = vunpack.c.l.b16 %v344
    %v578 = vunpack.c.l.b16 %v345
    %v579 = vunpack.c.h.b16 %v345
    %v580 = vunpack.c.l.b16 %v346
    %v581 = vunpack.c.l.b16 %v347
    %v582 = vunpack.c.h.b16 %v347
    %v583 = vunpack.c.l.b16 %v348
    %v584 = vunpack.c.l.b16 %v349
    %v585 = vunpack.c.h.b16 %v349
    %v586 = vunpack.c.l.b16 %v350
    %v587 = vunpack.c.l.b16 %v351
    %v588 = vunpack.c.h.b16 %v351
    %v589 = vunpack.c.l.b16 %v352
    %v590 = vunpack.c.l.b16 %v353
    %v591 = vunpack.c.h.b16 %v353
    %v592 = vunpack.c.l.b16 %v354
    %v593 = vunpack.c.l.b16 %v355
    %v594 = vunpack.c.h.b16 %v355
    %v595 = vunpack.c.l.b16 %v356
    %v596 = vunpack.c.l.b16 %v357
    %v597 = vunpack.c.h.b16 %v357
    %v598 = vunpack.c.l.b16 %v358
    %v599 = vunpack.c.l.b16 %v359
    %v600 = vunpack.c.h.b16 %v359
    %v601 = vunpack.c.l.b16 %v360
    %v602 = vunpack.c.l.b16 %v361
    %v603 = vunpack.c.h.b16 %v361
    %v604 = vunpack.c.l.b16 %v362
    %v605 = vunpack.c.l.b16 %v363
    %v606 = vunpack.c.h.b16 %v363
    %v607 = vunpack.c.l.b16 %v364
    %v608 = vunpack.c.l.b16 %v365
    %v609 = vunpack.c.h.b16 %v365
    %v610 = vunpack.c.l.b16 %v366
    %v611 = vunpack.c.l.b16 %v367
    %v612 = vunpack.c.h.b16 %v367
    %v613 = vunpack.c.l.b16 %v368
    %v614 = vunpack.c.l.b16 %v369
    %v615 = vunpack.c.h.b16 %v369
    %v616 = vunpack.c.l.b16 %v370
    %v617 = vunpack.c.l.b16 %v371
    %v618 = vunpack.c.h.b16 %v371
    %v619 = vunpack.c.l.b16 %v372
    %v620 = vunpack.c.l.b16 %v373
    %v621 = vunpack.c.h.b16 %v373
    %v622 = vunpack.c.l.b16 %v374
    %v623 = vunpack.c.l.b16 %v375
    %v624 = vunpack.c.h.b16 %v375
    %v625 = vunpack.c.l.b16 %v376
    %v626 = vunpack.c.l.b16 %v377
    %v627 = vunpack.c.h.b16 %v377
    %v628 = vunpack.c.l.b16 %v378
    %v629 = vunpack.c.l.b16 %v379
    %v630 = vunpack.c.h.b16 %v379
    %v631 = vunpack.c.l.b16 %v380
    %v632 = vunpack.c.l.b16 %v381
    %v633 = vunpack.c.h.b16 %v381
    %v634 = vunpack.c.l.b16 %v382
    %v635 = vunpack.c.l.b16 %v383
    %v636 = vunpack.c.h.b16 %v383
    %v637 = vunpack.c.l.b16 %v384
    %v638 = vunpack.c.l.b16 %v385
    %v639 = vunpack.c.h.b16 %v385
    %v640 = vunpack.c.l.b16 %v386
    %v641 = vunpack.c.l.b16 %v387
    %v642 = vunpack.c.h.b16 %v387
    %v643 = vunpack.c.l.b16 %v388
    %v644 = vunpack.c.l.b16 %v389
    %v645 = vunpack.c.h.b16 %v389
    %v646 = vunpack.c.l.b16 %v390
    %v647 = vunpack.c.l.b16 %v391
    %v648 = vunpack.c.h.b16 %v391
    %v649 = vunpack.c.l.b16 %v392
    %v650 = vunpack.c.l.b16 %v393
    %v651 = vunpack.c.h.b16 %v393
    %v652 = vunpack.c.l.b16 %v394
    %v653 = vunpack.c.l.b16 %v395
    %v654 = vunpack.c.h.b16 %v395
    %v655 = vunpack.c.l.b16 %v396
    %v656 = vunpack.c.l.b16 %v397
    %v657 = vunpack.c.h.b16 %v397
    %v658 = vunpack.c.l.b16 %v398
    %v659 = vunpack.c.l.b16 %v399
    %v660 = vunpack.c.h.b16 %v399
    %v661 = vunpack.c.l.b16 %v400
    %v662 = vunpack.c.l.b16 %v401
    %v663 = vunpack.c.h.b16 %v401
    %v664 = vunpack.c.l.b16 %v402
    %v665 = vunpack.c.l.b16 %v403
    %v666 = vunpack.c.h.b16 %v403
    %v667 = vunpack.c.l.b16 %v404
    %v668 = vunpack.c.l.b16 %v405
    %v669 = vunpack.c.h.b16 %v405
    %v670 = vunpack.c.l.b16 %v406
    %v671 = vunpack.c.l.b16 %v407
    %v672 = vunpack.c.h.b16 %v407
    %v673 = vunpack.c.l.b16 %v408
    %v674 = vunpack.c.l.b16 %v409
    %v675 = vunpack.c.h.b16 %v409
    %v676 = vunpack.c.l.b16 %v410
    %v677 = vunpack.c.l.b16 %v411
    %v678 = vunpack.c.h.b16 %v411
    %v679 = vunpack.c.l.b16 %v412
    %v680 = vpack.c.b16 %v533, %v530
    %v681 = vpack.c.b16 %v534, %v531
    %v682 = vpack.c.b16 %v535, %v532
    %v683 = vpack.c.b16 %v539, %v536
    %v684 = vpack.c.b16 %v540, %v537
    %v685 = vpack.c.b16 %v541, %v538
    %v686 = vpack.c.b16 %v545, %v542
    %v687 = vpack.c.b16 %v546, %v543
    %v688 = vpack.c.b16 %v547, %v544
    %v689 = vpack.c.b16 %v551, %v548
    %v690 = vpack.c.b16 %v552, %v549
    %v691 = vpack.c.b16 %v553, %v550
    %v692 = vpack.c.b16 %v557, %v554
    %v693 = vpack.c.b16 %v558, %v555
    %v694 = vpack.c.b16 %v559, %v556
    %v695 = vpack.c.b16 %v563, %v560
    %v696 = vpack.c.b16 %v564, %v561
    %v697 = vpack.c.b16 %v565, %v562
    %v698 = vpack.c.b16 %v569, %v566
    %v699 = vpack.c.b16 %v570, %v567
    %v700 = vpack.c.b16 %v571, %v568
    %v701 = vpack.c.b16 %v575, %v572
    %v702 = vpack.c.b16 %v576, %v573
    %v703 = vpack.c.b16 %v577, %v574
    %v704 = vpack.c.b16 %v581, %v578
    %v705 = vpack.c.b16 %v582, %v579
    %v706 = vpack.c.b16 %v583, %v580
    %v707 = vpack.c.b16 %v587, %v584
    %v708 = vpack.c.b16 %v588, %v585
    %v709 = vpack.c.b16 %v589, %v586
    %v710 = vpack.c.b16 %v593, %v590
    %v711 = vpack.c.b16 %v594, %v591
    %v712 = vpack.c.b16 %v595, %v592
    %v713 = vpack.c.b16 %v599, %v596
    %v714 = vpack.c.b16 %v600, %v597
    %v715 = vpack.c.b16 %v601, %v598
    %v716 = vpack.c.b16 %v605, %v602
    %v717 = vpack.c.b16 %v606, %v603
    %v718 = vpack.c.b16 %v607, %v604
    %v719 = vpack.c.b16 %v611, %v608
    %v720 = vpack.c.b16 %v612, %v609
    %v721 = vpack.c.b16 %v613, %v610
    %v722 = vpack.c.b16 %v617, %v614
    %v723 = vpack.c.b16 %v618, %v615
    %v724 = vpack.c.b16 %v619, %v616
    %v725 = vpack.c.b16 %v623, %v620
    %v726 = vpack.c.b16 %v624, %v621
    %v727 = vpack.c.b16 %v625, %v622
    %v728 = vpack.c.b16 %v629, %v626
    %v729 = vpack.c.b16 %v630, %v627
    %v730 = vpack.c.b16 %v631, %v628
    %v731 = vpack.c.b16 %v635, %v632
    %v732 = vpack.c.b16 %v636, %v633
    %v733 = vpack.c.b16 %v637, %v634
    %v734 = vpack.c.b16 %v641, %v638
    %v735 = vpack.c.b16 %v642, %v639
    %v736 = vpack.c.b16 %v643, %v640
    %v737 = vpack.c.b16 %v647, %v644
    %v738 = vpack.c.b16 %v648, %v645
    %v739 = vpack.c.b16 %v649, %v646
    %v740 = vpack.c.b16 %v653, %v650
    %v741 = vpack.c.b16 %v654, %v651
    %v742 = vpack.c.b16 %v655, %v652
    %v743 = vpack.c.b16 %v659, %v656
    %v744 = vpack.c.b16 %v660, %v657
    %v745 = vpack.c.b16 %v661, %v658
    %v746 = vpack.c.b16 %v665, %v662
    %v747 = vpack.c.b16 %v666, %v663
    %v748 = vpack.c.b16 %v667, %v664
    %v749 = vpack.c.b16 %v671, %v668
    %v750 = vpack.c.b16 %v672, %v669
    %v751 = vpack.c.b16 %v673, %v670
    %v752 = vpack.c.b16 %v677, %v674
    %v753 = vpack.c.b16 %v678, %v675
    %v754 = vpack.c.b16 %v679, %v676
    %vm830 = vcmask 130048
    %v832 = vsel %vm830, %v312, 0
    %834 = vmatprep.subr.bf16.mxu0 %v681
    %835 = vmatpush1.bf16.msra.mxu0 %v680
    %836 = vmatprep.subr.bf16.mxu0 %v684
    %837 = vmatpush1.bf16.msra.mxu0 %v683
    %838 = vmatprep.subr.bf16.mxu0 %v687
    %839 = vmatpush1.bf16.msra.mxu0 %v686
    %840 = vmatprep.subr.bf16.mxu0 %v690
    %841 = vmatpush1.bf16.msra.mxu0 %v689
    %842 = vmatprep.subr.bf16.mxu0 %v693
    %843 = vmatpush1.bf16.msra.mxu0 %v692
    %844 = vmatprep.subr.bf16.mxu0 %v696
    %845 = vmatpush1.bf16.msra.mxu0 %v695
    %846 = vmatprep.subr.bf16.mxu0 %v699
    %847 = vmatpush1.bf16.msra.mxu0 %v698
    %848 = vmatprep.subr.bf16.mxu0 %v702
    %849 = vmatpush1.bf16.msra.mxu0 %v701
    %850 = vmatprep.subr.bf16.mxu0 %v705
    %851 = vmatpush1.bf16.msra.mxu0 %v704
    %852 = vmatprep.subr.bf16.mxu0 %v708
    %853 = vmatpush1.bf16.msra.mxu0 %v707
    %854 = vmatprep.subr.bf16.mxu0 %v711
    %855 = vmatpush1.bf16.msra.mxu0 %v710
    %856 = vmatprep.subr.bf16.mxu0 %v714
    %857 = vmatpush1.bf16.msra.mxu0 %v713
    %858 = vmatprep.subr.bf16.mxu0 %v717
    %859 = vmatpush1.bf16.msra.mxu0 %v716
    %860 = vmatprep.subr.bf16.mxu0 %v720
    %861 = vmatpush1.bf16.msra.mxu0 %v719
    %862 = vmatprep.subr.bf16.mxu0 %v723
    %863 = vmatpush1.bf16.msra.mxu0 %v722
    %864 = vmatprep.subr.bf16.mxu0 %v726
    %865 = vmatpush1.bf16.msra.mxu0 %v725
    %866 = vmatprep.mubr.bf16.mxu0 %v310
    %867 = vmatmul.mubr.bf16.gmra.mrb[0].mxu0 %v309
    %v868 = vpop.f32.mrb[0].mxu0
    %v869 = vadd.f32 %v418, %v868
    %v870 = vpop.f32.mrb[0].mxu0
    %v871 = vadd.f32 %v422, %v870
    %v872 = vpop.f32.mrb[0].mxu0
    %v873 = vpop.f32.mrb[0].mxu0
    %874 = vdwg.mxu0
    %875 = vmatprep.subr.bf16.mxu0 %v729
    %876 = vmatpush1.bf16.msra.mxu0 %v728
    %877 = vmatprep.subr.bf16.mxu0 %v732
    %878 = vmatpush1.bf16.msra.mxu0 %v731
    %879 = vmatprep.subr.bf16.mxu0 %v735
    %880 = vmatpush1.bf16.msra.mxu0 %v734
    %881 = vmatprep.subr.bf16.mxu0 %v738
    %882 = vmatpush1.bf16.msra.mxu0 %v737
    %883 = vmatprep.subr.bf16.mxu0 %v741
    %884 = vmatpush1.bf16.msra.mxu0 %v740
    %885 = vmatprep.subr.bf16.mxu0 %v744
    %886 = vmatpush1.bf16.msra.mxu0 %v743
    %887 = vmatprep.subr.bf16.mxu0 %v747
    %888 = vmatpush1.bf16.msra.mxu0 %v746
    %889 = vmatprep.subr.bf16.mxu0 %v750
    %890 = vmatpush1.bf16.msra.mxu0 %v749
    %891 = vmatprep.subr.bf16.mxu0 %v753
    %892 = vmatpush1.bf16.msra.mxu0 %v752
    %893 = vmatprep.subr.bf16.mxu0 0
    %894 = vmatpush1.bf16.msra.mxu0 0
    %895 = vmatprep.subr.bf16.mxu0 0
    %896 = vmatpush1.bf16.msra.mxu0 0
    %897 = vmatprep.subr.bf16.mxu0 0
    %898 = vmatpush1.bf16.msra.mxu0 0
    %899 = vmatprep.subr.bf16.mxu0 0
    %900 = vmatpush1.bf16.msra.mxu0 0
    %901 = vmatprep.subr.bf16.mxu0 0
    %902 = vmatpush1.bf16.msra.mxu0 0
    %903 = vmatprep.subr.bf16.mxu0 0
    %904 = vmatpush1.bf16.msra.mxu0 0
    %905 = vmatprep.subr.bf16.mxu0 0
    %906 = vmatpush1.bf16.msra.mxu0 0
    %907 = vmatprep.mubr.bf16.mxu0 %v832
    %908 = vmatmul.mubr.bf16.gmra.mrb[0].mxu0 %v311
    %v909 = vpop.f32.mrb[0].mxu0
    %v910 = vadd.f32 %v869, %v909
    %v911 = vpop.f32.mrb[0].mxu0
    %v912 = vadd.f32 %v871, %v911
    %v913 = vpop.f32.mrb[0].mxu0
    %v914 = vpop.f32.mrb[0].mxu0
    %915 = vdwg.mxu0
    %916 = vmatprep.subr.bf16.mxu0 0
    %917 = vmatpush1.bf16.msra.mxu0 %v682
    %918 = vmatprep.subr.bf16.mxu0 0
    %919 = vmatpush1.bf16.msra.mxu0 %v685
    %920 = vmatprep.subr.bf16.mxu0 0
    %921 = vmatpush1.bf16.msra.mxu0 %v688
    %922 = vmatprep.subr.bf16.mxu0 0
    %923 = vmatpush1.bf16.msra.mxu0 %v691
    %924 = vmatprep.subr.bf16.mxu0 0
    %925 = vmatpush1.bf16.msra.mxu0 %v694
    %926 = vmatprep.subr.bf16.mxu0 0
    %927 = vmatpush1.bf16.msra.mxu0 %v697
    %928 = vmatprep.subr.bf16.mxu0 0
    %929 = vmatpush1.bf16.msra.mxu0 %v700
    %930 = vmatprep.subr.bf16.mxu0 0
    %931 = vmatpush1.bf16.msra.mxu0 %v703
    %932 = vmatprep.subr.bf16.mxu0 0
    %933 = vmatpush1.bf16.msra.mxu0 %v706
    %934 = vmatprep.subr.bf16.mxu0 0
    %935 = vmatpush1.bf16.msra.mxu0 %v709
    %936 = vmatprep.subr.bf16.mxu0 0
    %937 = vmatpush1.bf16.msra.mxu0 %v712
    %938 = vmatprep.subr.bf16.mxu0 0
    %939 = vmatpush1.bf16.msra.mxu0 %v715
    %940 = vmatprep.subr.bf16.mxu0 0
    %941 = vmatpush1.bf16.msra.mxu0 %v718
    %942 = vmatprep.subr.bf16.mxu0 0
    %943 = vmatpush1.bf16.msra.mxu0 %v721
    %944 = vmatprep.subr.bf16.mxu0 0
    %945 = vmatpush1.bf16.msra.mxu0 %v724
    %946 = vmatprep.subr.bf16.mxu0 0
    %947 = vmatpush1.bf16.msra.mxu0 %v727
    %948 = vmatprep.mubr.bf16.mxu0 %v310
    %949 = vmatmul.mubr.bf16.gmra.mrb[0].mxu0 %v309
    %v950 = vpop.f32.mrb[0].mxu0
    %v951 = vadd.f32 %v426, %v950
    %v952 = vpop.f32.mrb[0].mxu0
    %v953 = vpop.f32.mrb[0].mxu0
    %v954 = vpop.f32.mrb[0].mxu0
    %955 = vdwg.mxu0
    %956 = vmatprep.subr.bf16.mxu0 0
    %957 = vmatpush1.bf16.msra.mxu0 %v730
    %958 = vmatprep.subr.bf16.mxu0 0
    %959 = vmatpush1.bf16.msra.mxu0 %v733
    %960 = vmatprep.subr.bf16.mxu0 0
    %961 = vmatpush1.bf16.msra.mxu0 %v736
    %962 = vmatprep.subr.bf16.mxu0 0
    %963 = vmatpush1.bf16.msra.mxu0 %v739
    %964 = vmatprep.subr.bf16.mxu0 0
    %965 = vmatpush1.bf16.msra.mxu0 %v742
    %966 = vmatprep.subr.bf16.mxu0 0
    %967 = vmatpush1.bf16.msra.mxu0 %v745
    %968 = vmatprep.subr.bf16.mxu0 0
    %969 = vmatpush1.bf16.msra.mxu0 %v748
    %970 = vmatprep.subr.bf16.mxu0 0
    %971 = vmatpush1.bf16.msra.mxu0 %v751
    %972 = vmatprep.subr.bf16.mxu0 0
    %973 = vmatpush1.bf16.msra.mxu0 %v754
    %974 = vmatprep.subr.bf16.mxu0 0
    %975 = vmatpush1.bf16.msra.mxu0 0
    %976 = vmatprep.subr.bf16.mxu0 0
    %977 = vmatpush1.bf16.msra.mxu0 0
    %978 = vmatprep.subr.bf16.mxu0 0
    %979 = vmatpush1.bf16.msra.mxu0 0
    %980 = vmatprep.subr.bf16.mxu0 0
    %981 = vmatpush1.bf16.msra.mxu0 0
    %982 = vmatprep.subr.bf16.mxu0 0
    %983 = vmatpush1.bf16.msra.mxu0 0
    %984 = vmatprep.subr.bf16.mxu0 0
    %985 = vmatpush1.bf16.msra.mxu0 0
    %986 = vmatprep.subr.bf16.mxu0 0
    %987 = vmatpush1.bf16.msra.mxu0 0
    %988 = vmatprep.mubr.bf16.mxu0 %v832
    %989 = vmatmul.mubr.bf16.gmra.mrb[0].mxu0 %v311
    %v990 = vpop.f32.mrb[0].mxu0
    %v991 = vadd.f32 %v951, %v990
    %v992 = vpop.f32.mrb[0].mxu0
    %v993 = vpop.f32.mrb[0].mxu0
    %v994 = vpop.f32.mrb[0].mxu0
    %995 = vdwg.mxu0
    %v996 = vmax.f32 %v910, 0.0
    %v997 = vmax.f32 %v912, 0.0
    %v998 = vmax.f32 %v991, 0.0
    %v999 = vpack.c.bf16 %v305, %v305
    %v1000 = vpack.c.bf16 %v306, %v306
    %v1001 = vpack.c.bf16 %v307, %v307
    %v1002 = vpack.c.bf16 %v308, %v308
    %s1003 = scalar_lea.vmem [#allocation6], 600
    %v1004 = vld [vmem:[%s1003] sm:$0xff]
    %v1005 = vld [vmem:[%s1003 + $0x8] sm:$0xf]
    %v1006 = vld [vmem:[%s1003 + $0xc] sm:$0xff]
    %v1007 = vld [vmem:[%s1003 + $0x14] sm:$0xf]
    %v1008 = vld [vmem:[%s1003 + $0x18] sm:$0xff]
    %v1009 = vld [vmem:[%s1003 + $0x20] sm:$0xf]
    %v1010 = vld [vmem:[%s1003 + $0x24] sm:$0xff]
    %v1011 = vld [vmem:[%s1003 + $0x2c] sm:$0xf]
    %v1012 = vld [vmem:[%s1003 + $0x30] sm:$0xff]
    %v1013 = vld [vmem:[%s1003 + $0x38] sm:$0xf]
    %v1014 = vld [vmem:[%s1003 + $0x3c] sm:$0xff]
    %v1015 = vld [vmem:[%s1003 + $0x44] sm:$0xf]
    %v1016 = vld [vmem:[%s1003 + $0x48] sm:$0xff]
    %v1017 = vld [vmem:[%s1003 + $0x50] sm:$0xf]
    %v1018 = vld [vmem:[%s1003 + $0x54] sm:$0xff]
    %v1019 = vld [vmem:[%s1003 + $0x5c] sm:$0xf]
    %v1020 = vld [vmem:[%s1003 + $0x60] sm:$0xff]
    %v1021 = vld [vmem:[%s1003 + $0x68] sm:$0xf]
    %v1022 = vld [vmem:[%s1003 + $0x6c] sm:$0xff]
    %v1023 = vld [vmem:[%s1003 + $0x74] sm:$0xf]
    %v1024 = vld [vmem:[%s1003 + $0x78] sm:$0xff]
    %v1025 = vld [vmem:[%s1003 + $0x80] sm:$0xf]
    %v1026 = vld [vmem:[%s1003 + $0x84] sm:$0xff]
    %v1027 = vld [vmem:[%s1003 + $0x8c] sm:$0xf]
    %v1028 = vld [vmem:[%s1003 + $0x90] sm:$0xff]
    %v1029 = vld [vmem:[%s1003 + $0x98] sm:$0xf]
    %v1030 = vld [vmem:[%s1003 + $0x9c] sm:$0xff]
    %v1031 = vld [vmem:[%s1003 + $0xa4] sm:$0xf]
    %v1032 = vld [vmem:[%s1003 + $0xa8] sm:$0xff]
    %v1033 = vld [vmem:[%s1003 + $0xb0] sm:$0xf]
    %v1034 = vld [vmem:[%s1003 + $0xb4] sm:$0xff]
    %v1035 = vld [vmem:[%s1003 + $0xbc] sm:$0xf]
    %v1036 = vld [vmem:[%s1003 + $0xc0] sm:$0xff]
    %v1037 = vld [vmem:[%s1003 + $0xc8] sm:$0xf]
    %v1038 = vld [vmem:[%s1003 + $0xcc] sm:$0xff]
    %v1039 = vld [vmem:[%s1003 + $0xd4] sm:$0xf]
    %v1040 = vld [vmem:[%s1003 + $0xd8] sm:$0xff]
    %v1041 = vld [vmem:[%s1003 + $0xe0] sm:$0xf]
    %v1042 = vld [vmem:[%s1003 + $0xe4] sm:$0xff]
    %v1043 = vld [vmem:[%s1003 + $0xec] sm:$0xf]
    %v1044 = vld [vmem:[%s1003 + $0xf0] sm:$0xff]
    %v1045 = vld [vmem:[%s1003 + $0xf8] sm:$0xf]
    %v1046 = vld [vmem:[%s1003 + $0xfc] sm:$0xff]
    %v1047 = vld [vmem:[%s1003 + $0x104] sm:$0xf]
    %v1048 = vld [vmem:[%s1003 + $0x108] sm:$0xff]
    %v1049 = vld [vmem:[%s1003 + $0x110] sm:$0xf]
    %v1050 = vld [vmem:[%s1003 + $0x114] sm:$0xff]
    %v1051 = vld [vmem:[%s1003 + $0x11c] sm:$0xf]
    %v1052 = vld [vmem:[%s1003 + $0x120] sm:$0xff]
    %v1053 = vld [vmem:[%s1003 + $0x128] sm:$0xf]
    %v1054 = vld [vmem:[%s1003 + $0x12c] sm:$0xff]
    %v1055 = vld [vmem:[%s1003 + $0x134] sm:$0xf]
    %v1056 = vld [vmem:[%s1003 + $0x138] sm:$0xff]
    %v1057 = vld [vmem:[%s1003 + $0x140] sm:$0xf]
    %v1058 = vld [vmem:[%s1003 + $0x144] sm:$0xff]
    %v1059 = vld [vmem:[%s1003 + $0x14c] sm:$0xf]
    %v1060 = vld [vmem:[%s1003 + $0x150] sm:$0xff]
    %v1061 = vld [vmem:[%s1003 + $0x158] sm:$0xf]
    %v1062 = vld [vmem:[%s1003 + $0x15c] sm:$0xff]
    %v1063 = vld [vmem:[%s1003 + $0x164] sm:$0xf]
    %v1064 = vld [vmem:[%s1003 + $0x168] sm:$0xff]
    %v1065 = vld [vmem:[%s1003 + $0x170] sm:$0xf]
    %v1066 = vld [vmem:[%s1003 + $0x174] sm:$0xff]
    %v1067 = vld [vmem:[%s1003 + $0x17c] sm:$0xf]
    %v1068 = vld [vmem:[%s1003 + $0x180] sm:$0xff]
    %v1069 = vld [vmem:[%s1003 + $0x188] sm:$0xf]
    %v1070 = vld [vmem:[%s1003 + $0x18c] sm:$0xff]
    %v1071 = vld [vmem:[%s1003 + $0x194] sm:$0xf]
    %v1072 = vld [vmem:[%s1003 + $0x198] sm:$0xff]
    %v1073 = vld [vmem:[%s1003 + $0x1a0] sm:$0xf]
    %v1074 = vld [vmem:[%s1003 + $0x1a4] sm:$0xff]
    %v1075 = vld [vmem:[%s1003 + $0x1ac] sm:$0xf]
    %v1076 = vld [vmem:[%s1003 + $0x1b0] sm:$0xff]
    %v1077 = vld [vmem:[%s1003 + $0x1b8] sm:$0xf]
    %v1078 = vld [vmem:[%s1003 + $0x1bc] sm:$0xff]
    %v1079 = vld [vmem:[%s1003 + $0x1c4] sm:$0xf]
    %v1080 = vld [vmem:[%s1003 + $0x1c8] sm:$0xff]
    %v1081 = vld [vmem:[%s1003 + $0x1d0] sm:$0xf]
    %v1082 = vld [vmem:[%s1003 + $0x1d4] sm:$0xff]
    %v1083 = vld [vmem:[%s1003 + $0x1dc] sm:$0xf]
    %v1084 = vld [vmem:[%s1003 + $0x1e0] sm:$0xff]
    %v1085 = vld [vmem:[%s1003 + $0x1e8] sm:$0xf]
    %v1086 = vld [vmem:[%s1003 + $0x1ec] sm:$0xff]
    %v1087 = vld [vmem:[%s1003 + $0x1f4] sm:$0xf]
    %v1088 = vld [vmem:[%s1003 + $0x1f8] sm:$0xff]
    %v1089 = vld [vmem:[%s1003 + $0x200] sm:$0xf]
    %v1090 = vld [vmem:[%s1003 + $0x204] sm:$0xff]
    %v1091 = vld [vmem:[%s1003 + $0x20c] sm:$0xf]
    %v1092 = vld [vmem:[%s1003 + $0x210] sm:$0xff]
    %v1093 = vld [vmem:[%s1003 + $0x218] sm:$0xf]
    %v1094 = vld [vmem:[%s1003 + $0x21c] sm:$0xff]
    %v1095 = vld [vmem:[%s1003 + $0x224] sm:$0xf]
    %v1096 = vld [vmem:[%s1003 + $0x228] sm:$0xff]
    %v1097 = vld [vmem:[%s1003 + $0x230] sm:$0xf]
    %v1098 = vld [vmem:[%s1003 + $0x234] sm:$0xff]
    %v1099 = vld [vmem:[%s1003 + $0x23c] sm:$0xf]
    %v1100 = vld [vmem:[%s1003 + $0x240] sm:$0xff]
    %v1101 = vld [vmem:[%s1003 + $0x248] sm:$0xf]
    %v1102 = vld [vmem:[%s1003 + $0x24c] sm:$0xff]
    %v1103 = vld [vmem:[%s1003 + $0x254] sm:$0xf]
    %s1104 = scalar_lea.vmem %s3, 3
    %v1105 = vld [vmem:[%s1104] sm:$0x7]
    %v1107 = vlaneseq
    %v1108 = vshrl.u32 %v1107, 7
    %v1109 = vsub.s32 0, %v1108
    %v1110 = vrot.slane %v1105, %v1109
    %v1111 = vlaneseq
    %v1112 = vshrl.u32 %v1111, 7
    %v1113 = vsub.s32 1, %v1112
    %v1114 = vrot.slane %v1105, %v1113
    %v1115 = vlaneseq
    %v1116 = vshrl.u32 %v1115, 7
    %v1117 = vsub.s32 2, %v1116
    %v1118 = vrot.slane %v1105, %v1117
    %v1222 = vunpack.c.l.b16 %v1004
    %v1223 = vunpack.c.h.b16 %v1004
    %v1224 = vunpack.c.l.b16 %v1005
    %v1225 = vunpack.c.l.b16 %v1006
    %v1226 = vunpack.c.h.b16 %v1006
    %v1227 = vunpack.c.l.b16 %v1007
    %v1228 = vunpack.c.l.b16 %v1008
    %v1229 = vunpack.c.h.b16 %v1008
    %v1230 = vunpack.c.l.b16 %v1009
    %v1231 = vunpack.c.l.b16 %v1010
    %v1232 = vunpack.c.h.b16 %v1010
    %v1233 = vunpack.c.l.b16 %v1011
    %v1234 = vunpack.c.l.b16 %v1012
    %v1235 = vunpack.c.h.b16 %v1012
    %v1236 = vunpack.c.l.b16 %v1013
    %v1237 = vunpack.c.l.b16 %v1014
    %v1238 = vunpack.c.h.b16 %v1014
    %v1239 = vunpack.c.l.b16 %v1015
    %v1240 = vunpack.c.l.b16 %v1016
    %v1241 = vunpack.c.h.b16 %v1016
    %v1242 = vunpack.c.l.b16 %v1017
    %v1243 = vunpack.c.l.b16 %v1018
    %v1244 = vunpack.c.h.b16 %v1018
    %v1245 = vunpack.c.l.b16 %v1019
    %v1246 = vunpack.c.l.b16 %v1020
    %v1247 = vunpack.c.h.b16 %v1020
    %v1248 = vunpack.c.l.b16 %v1021
    %v1249 = vunpack.c.l.b16 %v1022
    %v1250 = vunpack.c.h.b16 %v1022
    %v1251 = vunpack.c.l.b16 %v1023
    %v1252 = vunpack.c.l.b16 %v1024
    %v1253 = vunpack.c.h.b16 %v1024
    %v1254 = vunpack.c.l.b16 %v1025
    %v1255 = vunpack.c.l.b16 %v1026
    %v1256 = vunpack.c.h.b16 %v1026
    %v1257 = vunpack.c.l.b16 %v1027
    %v1258 = vunpack.c.l.b16 %v1028
    %v1259 = vunpack.c.h.b16 %v1028
    %v1260 = vunpack.c.l.b16 %v1029
    %v1261 = vunpack.c.l.b16 %v1030
    %v1262 = vunpack.c.h.b16 %v1030
    %v1263 = vunpack.c.l.b16 %v1031
    %v1264 = vunpack.c.l.b16 %v1032
    %v1265 = vunpack.c.h.b16 %v1032
    %v1266 = vunpack.c.l.b16 %v1033
    %v1267 = vunpack.c.l.b16 %v1034
    %v1268 = vunpack.c.h.b16 %v1034
    %v1269 = vunpack.c.l.b16 %v1035
    %v1270 = vunpack.c.l.b16 %v1036
    %v1271 = vunpack.c.h.b16 %v1036
    %v1272 = vunpack.c.l.b16 %v1037
    %v1273 = vunpack.c.l.b16 %v1038
    %v1274 = vunpack.c.h.b16 %v1038
    %v1275 = vunpack.c.l.b16 %v1039
    %v1276 = vunpack.c.l.b16 %v1040
    %v1277 = vunpack.c.h.b16 %v1040
    %v1278 = vunpack.c.l.b16 %v1041
    %v1279 = vunpack.c.l.b16 %v1042
    %v1280 = vunpack.c.h.b16 %v1042
    %v1281 = vunpack.c.l.b16 %v1043
    %v1282 = vunpack.c.l.b16 %v1044
    %v1283 = vunpack.c.h.b16 %v1044
    %v1284 = vunpack.c.l.b16 %v1045
    %v1285 = vunpack.c.l.b16 %v1046
    %v1286 = vunpack.c.h.b16 %v1046
    %v1287 = vunpack.c.l.b16 %v1047
    %v1288 = vunpack.c.l.b16 %v1048
    %v1289 = vunpack.c.h.b16 %v1048
    %v1290 = vunpack.c.l.b16 %v1049
    %v1291 = vunpack.c.l.b16 %v1050
    %v1292 = vunpack.c.h.b16 %v1050
    %v1293 = vunpack.c.l.b16 %v1051
    %v1294 = vunpack.c.l.b16 %v1052
    %v1295 = vunpack.c.h.b16 %v1052
    %v1296 = vunpack.c.l.b16 %v1053
    %v1297 = vunpack.c.l.b16 %v1054
    %v1298 = vunpack.c.h.b16 %v1054
    %v1299 = vunpack.c.l.b16 %v1055
    %v1300 = vunpack.c.l.b16 %v1056
    %v1301 = vunpack.c.h.b16 %v1056
    %v1302 = vunpack.c.l.b16 %v1057
    %v1303 = vunpack.c.l.b16 %v1058
    %v1304 = vunpack.c.h.b16 %v1058
    %v1305 = vunpack.c.l.b16 %v1059
    %v1306 = vunpack.c.l.b16 %v1060
    %v1307 = vunpack.c.h.b16 %v1060
    %v1308 = vunpack.c.l.b16 %v1061
    %v1309 = vunpack.c.l.b16 %v1062
    %v1310 = vunpack.c.h.b16 %v1062
    %v1311 = vunpack.c.l.b16 %v1063
    %v1312 = vunpack.c.l.b16 %v1064
    %v1313 = vunpack.c.h.b16 %v1064
    %v1314 = vunpack.c.l.b16 %v1065
    %v1315 = vunpack.c.l.b16 %v1066
    %v1316 = vunpack.c.h.b16 %v1066
    %v1317 = vunpack.c.l.b16 %v1067
    %v1318 = vunpack.c.l.b16 %v1068
    %v1319 = vunpack.c.h.b16 %v1068
    %v1320 = vunpack.c.l.b16 %v1069
    %v1321 = vunpack.c.l.b16 %v1070
    %v1322 = vunpack.c.h.b16 %v1070
    %v1323 = vunpack.c.l.b16 %v1071
    %v1324 = vunpack.c.l.b16 %v1072
    %v1325 = vunpack.c.h.b16 %v1072
    %v1326 = vunpack.c.l.b16 %v1073
    %v1327 = vunpack.c.l.b16 %v1074
    %v1328 = vunpack.c.h.b16 %v1074
    %v1329 = vunpack.c.l.b16 %v1075
    %v1330 = vunpack.c.l.b16 %v1076
    %v1331 = vunpack.c.h.b16 %v1076
    %v1332 = vunpack.c.l.b16 %v1077
    %v1333 = vunpack.c.l.b16 %v1078
    %v1334 = vunpack.c.h.b16 %v1078
    %v1335 = vunpack.c.l.b16 %v1079
    %v1336 = vunpack.c.l.b16 %v1080
    %v1337 = vunpack.c.h.b16 %v1080
    %v1338 = vunpack.c.l.b16 %v1081
    %v1339 = vunpack.c.l.b16 %v1082
    %v1340 = vunpack.c.h.b16 %v1082
    %v1341 = vunpack.c.l.b16 %v1083
    %v1342 = vunpack.c.l.b16 %v1084
    %v1343 = vunpack.c.h.b16 %v1084
    %v1344 = vunpack.c.l.b16 %v1085
    %v1345 = vunpack.c.l.b16 %v1086
    %v1346 = vunpack.c.h.b16 %v1086
    %v1347 = vunpack.c.l.b16 %v1087
    %v1348 = vunpack.c.l.b16 %v1088
    %v1349 = vunpack.c.h.b16 %v1088
    %v1350 = vunpack.c.l.b16 %v1089
    %v1351 = vunpack.c.l.b16 %v1090
    %v1352 = vunpack.c.h.b16 %v1090
    %v1353 = vunpack.c.l.b16 %v1091
    %v1354 = vunpack.c.l.b16 %v1092
    %v1355 = vunpack.c.h.b16 %v1092
    %v1356 = vunpack.c.l.b16 %v1093
    %v1357 = vunpack.c.l.b16 %v1094
    %v1358 = vunpack.c.h.b16 %v1094
    %v1359 = vunpack.c.l.b16 %v1095
    %v1360 = vunpack.c.l.b16 %v1096
    %v1361 = vunpack.c.h.b16 %v1096
    %v1362 = vunpack.c.l.b16 %v1097
    %v1363 = vunpack.c.l.b16 %v1098
    %v1364 = vunpack.c.h.b16 %v1098
    %v1365 = vunpack.c.l.b16 %v1099
    %v1366 = vunpack.c.l.b16 %v1100
    %v1367 = vunpack.c.h.b16 %v1100
    %v1368 = vunpack.c.l.b16 %v1101
    %v1369 = vunpack.c.l.b16 %v1102
    %v1370 = vunpack.c.h.b16 %v1102
    %v1371 = vunpack.c.l.b16 %v1103
    %v1372 = vpack.c.b16 %v1225, %v1222
    %v1373 = vpack.c.b16 %v1226, %v1223
    %v1374 = vpack.c.b16 %v1227, %v1224
    %v1375 = vpack.c.b16 %v1231, %v1228
    %v1376 = vpack.c.b16 %v1232, %v1229
    %v1377 = vpack.c.b16 %v1233, %v1230
    %v1378 = vpack.c.b16 %v1237, %v1234
    %v1379 = vpack.c.b16 %v1238, %v1235
    %v1380 = vpack.c.b16 %v1239, %v1236
    %v1381 = vpack.c.b16 %v1243, %v1240
    %v1382 = vpack.c.b16 %v1244, %v1241
    %v1383 = vpack.c.b16 %v1245, %v1242
    %v1384 = vpack.c.b16 %v1249, %v1246
    %v1385 = vpack.c.b16 %v1250, %v1247
    %v1386 = vpack.c.b16 %v1251, %v1248
    %v1387 = vpack.c.b16 %v1255, %v1252
    %v1388 = vpack.c.b16 %v1256, %v1253
    %v1389 = vpack.c.b16 %v1257, %v1254
    %v1390 = vpack.c.b16 %v1261, %v1258
    %v1391 = vpack.c.b16 %v1262, %v1259
    %v1392 = vpack.c.b16 %v1263, %v1260
    %v1393 = vpack.c.b16 %v1267, %v1264
    %v1394 = vpack.c.b16 %v1268, %v1265
    %v1395 = vpack.c.b16 %v1269, %v1266
    %v1396 = vpack.c.b16 %v1273, %v1270
    %v1397 = vpack.c.b16 %v1274, %v1271
    %v1398 = vpack.c.b16 %v1275, %v1272
    %v1399 = vpack.c.b16 %v1279, %v1276
    %v1400 = vpack.c.b16 %v1280, %v1277
    %v1401 = vpack.c.b16 %v1281, %v1278
    %v1402 = vpack.c.b16 %v1285, %v1282
    %v1403 = vpack.c.b16 %v1286, %v1283
    %v1404 = vpack.c.b16 %v1287, %v1284
    %v1405 = vpack.c.b16 %v1291, %v1288
    %v1406 = vpack.c.b16 %v1292, %v1289
    %v1407 = vpack.c.b16 %v1293, %v1290
    %v1408 = vpack.c.b16 %v1297, %v1294
    %v1409 = vpack.c.b16 %v1298, %v1295
    %v1410 = vpack.c.b16 %v1299, %v1296
    %v1411 = vpack.c.b16 %v1303, %v1300
    %v1412 = vpack.c.b16 %v1304, %v1301
    %v1413 = vpack.c.b16 %v1305, %v1302
    %v1414 = vpack.c.b16 %v1309, %v1306
    %v1415 = vpack.c.b16 %v1310, %v1307
    %v1416 = vpack.c.b16 %v1311, %v1308
    %v1417 = vpack.c.b16 %v1315, %v1312
    %v1418 = vpack.c.b16 %v1316, %v1313
    %v1419 = vpack.c.b16 %v1317, %v1314
    %v1420 = vpack.c.b16 %v1321, %v1318
    %v1421 = vpack.c.b16 %v1322, %v1319
    %v1422 = vpack.c.b16 %v1323, %v1320
    %v1423 = vpack.c.b16 %v1327, %v1324
    %v1424 = vpack.c.b16 %v1328, %v1325
    %v1425 = vpack.c.b16 %v1329, %v1326
    %v1426 = vpack.c.b16 %v1333, %v1330
    %v1427 = vpack.c.b16 %v1334, %v1331
    %v1428 = vpack.c.b16 %v1335, %v1332
    %v1429 = vpack.c.b16 %v1339, %v1336
    %v1430 = vpack.c.b16 %v1340, %v1337
    %v1431 = vpack.c.b16 %v1341, %v1338
    %v1432 = vpack.c.b16 %v1345, %v1342
    %v1433 = vpack.c.b16 %v1346, %v1343
    %v1434 = vpack.c.b16 %v1347, %v1344
    %v1435 = vpack.c.b16 %v1351, %v1348
    %v1436 = vpack.c.b16 %v1352, %v1349
    %v1437 = vpack.c.b16 %v1353, %v1350
    %v1438 = vpack.c.b16 %v1357, %v1354
    %v1439 = vpack.c.b16 %v1358, %v1355
    %v1440 = vpack.c.b16 %v1359, %v1356
    %v1441 = vpack.c.b16 %v1363, %v1360
    %v1442 = vpack.c.b16 %v1364, %v1361
    %v1443 = vpack.c.b16 %v1365, %v1362
    %v1444 = vpack.c.b16 %v1369, %v1366
    %v1445 = vpack.c.b16 %v1370, %v1367
    %v1446 = vpack.c.b16 %v1371, %v1368
    %v1523 = vsel %vm830, %v1002, 0
    %1525 = vmatprep.subr.bf16.mxu0 %v1373
    %1526 = vmatpush1.bf16.msra.mxu0 %v1372
    %1527 = vmatprep.subr.bf16.mxu0 %v1376
    %1528 = vmatpush1.bf16.msra.mxu0 %v1375
    %1529 = vmatprep.subr.bf16.mxu0 %v1379
    %1530 = vmatpush1.bf16.msra.mxu0 %v1378
    %1531 = vmatprep.subr.bf16.mxu0 %v1382
    %1532 = vmatpush1.bf16.msra.mxu0 %v1381
    %1533 = vmatprep.subr.bf16.mxu0 %v1385
    %1534 = vmatpush1.bf16.msra.mxu0 %v1384
    %1535 = vmatprep.subr.bf16.mxu0 %v1388
    %1536 = vmatpush1.bf16.msra.mxu0 %v1387
    %1537 = vmatprep.subr.bf16.mxu0 %v1391
    %1538 = vmatpush1.bf16.msra.mxu0 %v1390
    %1539 = vmatprep.subr.bf16.mxu0 %v1394
    %1540 = vmatpush1.bf16.msra.mxu0 %v1393
    %1541 = vmatprep.subr.bf16.mxu0 %v1397
    %1542 = vmatpush1.bf16.msra.mxu0 %v1396
    %1543 = vmatprep.subr.bf16.mxu0 %v1400
    %1544 = vmatpush1.bf16.msra.mxu0 %v1399
    %1545 = vmatprep.subr.bf16.mxu0 %v1403
    %1546 = vmatpush1.bf16.msra.mxu0 %v1402
    %1547 = vmatprep.subr.bf16.mxu0 %v1406
    %1548 = vmatpush1.bf16.msra.mxu0 %v1405
    %1549 = vmatprep.subr.bf16.mxu0 %v1409
    %1550 = vmatpush1.bf16.msra.mxu0 %v1408
    %1551 = vmatprep.subr.bf16.mxu0 %v1412
    %1552 = vmatpush1.bf16.msra.mxu0 %v1411
    %1553 = vmatprep.subr.bf16.mxu0 %v1415
    %1554 = vmatpush1.bf16.msra.mxu0 %v1414
    %1555 = vmatprep.subr.bf16.mxu0 %v1418
    %1556 = vmatpush1.bf16.msra.mxu0 %v1417
    %1557 = vmatprep.mubr.bf16.mxu0 %v1000
    %1558 = vmatmul.mubr.bf16.gmra.mrb[0].mxu0 %v999
    %v1559 = vpop.f32.mrb[0].mxu0
    %v1560 = vadd.f32 %v1110, %v1559
    %v1561 = vpop.f32.mrb[0].mxu0
    %v1562 = vadd.f32 %v1114, %v1561
    %v1563 = vpop.f32.mrb[0].mxu0
    %v1564 = vpop.f32.mrb[0].mxu0
    %1565 = vdwg.mxu0
    %1566 = vmatprep.subr.bf16.mxu0 %v1421
    %1567 = vmatpush1.bf16.msra.mxu0 %v1420
    %1568 = vmatprep.subr.bf16.mxu0 %v1424
    %1569 = vmatpush1.bf16.msra.mxu0 %v1423
    %1570 = vmatprep.subr.bf16.mxu0 %v1427
    %1571 = vmatpush1.bf16.msra.mxu0 %v1426
    %1572 = vmatprep.subr.bf16.mxu0 %v1430
    %1573 = vmatpush1.bf16.msra.mxu0 %v1429
    %1574 = vmatprep.subr.bf16.mxu0 %v1433
    %1575 = vmatpush1.bf16.msra.mxu0 %v1432
    %1576 = vmatprep.subr.bf16.mxu0 %v1436
    %1577 = vmatpush1.bf16.msra.mxu0 %v1435
    %1578 = vmatprep.subr.bf16.mxu0 %v1439
    %1579 = vmatpush1.bf16.msra.mxu0 %v1438
    %1580 = vmatprep.subr.bf16.mxu0 %v1442
    %1581 = vmatpush1.bf16.msra.mxu0 %v1441
    %1582 = vmatprep.subr.bf16.mxu0 %v1445
    %1583 = vmatpush1.bf16.msra.mxu0 %v1444
    %1584 = vmatprep.subr.bf16.mxu0 0
    %1585 = vmatpush1.bf16.msra.mxu0 0
    %1586 = vmatprep.subr.bf16.mxu0 0
    %1587 = vmatpush1.bf16.msra.mxu0 0
    %1588 = vmatprep.subr.bf16.mxu0 0
    %1589 = vmatpush1.bf16.msra.mxu0 0
    %1590 = vmatprep.subr.bf16.mxu0 0
    %1591 = vmatpush1.bf16.msra.mxu0 0
    %1592 = vmatprep.subr.bf16.mxu0 0
    %1593 = vmatpush1.bf16.msra.mxu0 0
    %1594 = vmatprep.subr.bf16.mxu0 0
    %1595 = vmatpush1.bf16.msra.mxu0 0
    %1596 = vmatprep.subr.bf16.mxu0 0
    %1597 = vmatpush1.bf16.msra.mxu0 0
    %1598 = vmatprep.mubr.bf16.mxu0 %v1523
    %1599 = vmatmul.mubr.bf16.gmra.mrb[0].mxu0 %v1001
    %v1600 = vpop.f32.mrb[0].mxu0
    %v1601 = vadd.f32 %v1560, %v1600
    %v1602 = vpop.f32.mrb[0].mxu0
    %v1603 = vadd.f32 %v1562, %v1602
    %v1604 = vpop.f32.mrb[0].mxu0
    %v1605 = vpop.f32.mrb[0].mxu0
    %1606 = vdwg.mxu0
    %1607 = vmatprep.subr.bf16.mxu0 0
    %1608 = vmatpush1.bf16.msra.mxu0 %v1374
    %1609 = vmatprep.subr.bf16.mxu0 0
    %1610 = vmatpush1.bf16.msra.mxu0 %v1377
    %1611 = vmatprep.subr.bf16.mxu0 0
    %1612 = vmatpush1.bf16.msra.mxu0 %v1380
    %1613 = vmatprep.subr.bf16.mxu0 0
    %1614 = vmatpush1.bf16.msra.mxu0 %v1383
    %1615 = vmatprep.subr.bf16.mxu0 0
    %1616 = vmatpush1.bf16.msra.mxu0 %v1386
    %1617 = vmatprep.subr.bf16.mxu0 0
    %1618 = vmatpush1.bf16.msra.mxu0 %v1389
    %1619 = vmatprep.subr.bf16.mxu0 0
    %1620 = vmatpush1.bf16.msra.mxu0 %v1392
    %1621 = vmatprep.subr.bf16.mxu0 0
    %1622 = vmatpush1.bf16.msra.mxu0 %v1395
    %1623 = vmatprep.subr.bf16.mxu0 0
    %1624 = vmatpush1.bf16.msra.mxu0 %v1398
    %1625 = vmatprep.subr.bf16.mxu0 0
    %1626 = vmatpush1.bf16.msra.mxu0 %v1401
    %1627 = vmatprep.subr.bf16.mxu0 0
    %1628 = vmatpush1.bf16.msra.mxu0 %v1404
    %1629 = vmatprep.subr.bf16.mxu0 0
    %1630 = vmatpush1.bf16.msra.mxu0 %v1407
    %1631 = vmatprep.subr.bf16.mxu0 0
    %1632 = vmatpush1.bf16.msra.mxu0 %v1410
    %1633 = vmatprep.subr.bf16.mxu0 0
    %1634 = vmatpush1.bf16.msra.mxu0 %v1413
    %1635 = vmatprep.subr.bf16.mxu0 0
    %1636 = vmatpush1.bf16.msra.mxu0 %v1416
    %1637 = vmatprep.subr.bf16.mxu0 0
    %1638 = vmatpush1.bf16.msra.mxu0 %v1419
    %1639 = vmatprep.mubr.bf16.mxu0 %v1000
    %1640 = vmatmul.mubr.bf16.gmra.mrb[0].mxu0 %v999
    %v1641 = vpop.f32.mrb[0].mxu0
    %v1642 = vadd.f32 %v1118, %v1641
    %v1643 = vpop.f32.mrb[0].mxu0
    %v1644 = vpop.f32.mrb[0].mxu0
    %v1645 = vpop.f32.mrb[0].mxu0
    %1646 = vdwg.mxu0
    %1647 = vmatprep.subr.bf16.mxu0 0
    %1648 = vmatpush1.bf16.msra.mxu0 %v1422
    %1649 = vmatprep.subr.bf16.mxu0 0
    %1650 = vmatpush1.bf16.msra.mxu0 %v1425
    %1651 = vmatprep.subr.bf16.mxu0 0
    %1652 = vmatpush1.bf16.msra.mxu0 %v1428
    %1653 = vmatprep.subr.bf16.mxu0 0
    %1654 = vmatpush1.bf16.msra.mxu0 %v1431
    %1655 = vmatprep.subr.bf16.mxu0 0
    %1656 = vmatpush1.bf16.msra.mxu0 %v1434
    %1657 = vmatprep.subr.bf16.mxu0 0
    %1658 = vmatpush1.bf16.msra.mxu0 %v1437
    %1659 = vmatprep.subr.bf16.mxu0 0
    %1660 = vmatpush1.bf16.msra.mxu0 %v1440
    %1661 = vmatprep.subr.bf16.mxu0 0
    %1662 = vmatpush1.bf16.msra.mxu0 %v1443
    %1663 = vmatprep.subr.bf16.mxu0 0
    %1664 = vmatpush1.bf16.msra.mxu0 %v1446
    %1665 = vmatprep.subr.bf16.mxu0 0
    %1666 = vmatpush1.bf16.msra.mxu0 0
    %1667 = vmatprep.subr.bf16.mxu0 0
    %1668 = vmatpush1.bf16.msra.mxu0 0
    %1669 = vmatprep.subr.bf16.mxu0 0
    %1670 = vmatpush1.bf16.msra.mxu0 0
    %1671 = vmatprep.subr.bf16.mxu0 0
    %1672 = vmatpush1.bf16.msra.mxu0 0
    %1673 = vmatprep.subr.bf16.mxu0 0
    %1674 = vmatpush1.bf16.msra.mxu0 0
    %1675 = vmatprep.subr.bf16.mxu0 0
    %1676 = vmatpush1.bf16.msra.mxu0 0
    %1677 = vmatprep.subr.bf16.mxu0 0
    %1678 = vmatpush1.bf16.msra.mxu0 0
    %1679 = vmatprep.mubr.bf16.mxu0 %v1523
    %1680 = vmatmul.mubr.bf16.gmra.mrb[0].mxu0 %v1001
    %v1681 = vpop.f32.mrb[0].mxu0
    %v1682 = vadd.f32 %v1642, %v1681
    %v1683 = vpop.f32.mrb[0].mxu0
    %v1684 = vpop.f32.mrb[0].mxu0
    %v1685 = vpop.f32.mrb[0].mxu0
    %1686 = vdwg.mxu0
    %v1687 = vmax.f32 %v1601, 0.0
    %v1688 = vmax.f32 %v1603, 0.0
    %v1689 = vmax.f32 %v1682, 0.0
    %v1690 = vld [vmem:[%s4] ss:$2 sm:$0x7]
    %v1692 = vlaneseq
    %v1693 = vshrl.u32 %v1692, 7
    %v1694 = vsub.s32 0, %v1693
    %v1695 = vrot.slane %v1690, %v1694
    %v1696 = vlaneseq
    %v1697 = vshrl.u32 %v1696, 7
    %v1698 = vsub.s32 1, %v1697
    %v1699 = vrot.slane %v1690, %v1698
    %v1700 = vlaneseq
    %v1701 = vshrl.u32 %v1700, 7
    %v1702 = vsub.s32 2, %v1701
    %v1703 = vrot.slane %v1690, %v1702
    %v1707 = vmul.f32 %v996, %v1695
    %v1708 = vmul.f32 %v997, %v1699
    %v1709 = vmul.f32 %v998, %v1703
    %v1710 = vadd.f32 %v1707, %v1708
    %vm1711 = vcmask 359424
    %v1712 = vsel %vm1711, %v1709, 0.0
    %v1713 = vadd.f32 %v1710, %v1712
    %1714 = vadd.xlane.f32.xlu0 %v1713
    %v1715 = vpop.xlane.xlu0 %1714
    %v1716 = vld [vmem:[%s5] sm:$0x1]
    %v1718 = vlaneseq
    %v1719 = vshrl.u32 %v1718, 7
    %v1720 = vsub.s32 0, %v1719
    %v1721 = vrot.slane %v1716, %v1720
    %v1723 = vadd.f32 %v1715, %v1721
    %s1724 = scalar_lea.vmem %s4, 1
    %v1725 = vld [vmem:[%s1724] ss:$2 sm:$0x7]
    %v1727 = vlaneseq
    %v1728 = vshrl.u32 %v1727, 7
    %v1729 = vsub.s32 0, %v1728
    %v1730 = vrot.slane %v1725, %v1729
    %v1731 = vlaneseq
    %v1732 = vshrl.u32 %v1731, 7
    %v1733 = vsub.s32 1, %v1732
    %v1734 = vrot.slane %v1725, %v1733
    %v1735 = vlaneseq
    %v1736 = vshrl.u32 %v1735, 7
    %v1737 = vsub.s32 2, %v1736
    %v1738 = vrot.slane %v1725, %v1737
    %v1742 = vmul.f32 %v1687, %v1730
    %v1743 = vmul.f32 %v1688, %v1734
    %v1744 = vmul.f32 %v1689, %v1738
    %v1745 = vadd.f32 %v1742, %v1743
    %v1746 = vsel %vm1711, %v1744, 0.0
    %v1747 = vadd.f32 %v1745, %v1746
    %1748 = vadd.xlane.f32.xlu0 %v1747
    %v1749 = vpop.xlane.xlu0 %1748
    %v1750 = vadd.f32 %v1749, %v1721
    %1752 = vrot.lane.b32.xlu0 %v1750, 127
    %v1753 = vpop.permute.xlu0 %1752
    %v1755 = vsub.f32 %v1723, %v1753
    %v1756 = vand.u32 2147483647, %v1755
    %v1757 = vmul.f32 %v1756, 0.5
    %1759 = vrot.lane.b32.xlu0 %v1757, 2
    %v1760 = vpop.permute.xlu0 %1759
    %vm1762 = vcmask 7168
    %v1763 = vsel %vm1762, %v1723, %v1750
    %vm1764 = vcmask 15360
    %v1765 = vsel %vm1764, %v1763, %v1760
    %vm1766 = vcmask 23552
    %1767 = vst.msk [vmem:[%s6] sm:$0xff] %vm1766, %v1765
    // Predicated region
    $region38: #{tpu_custom_call.1} parent=1 // pred_check
      _
    $region39: #{tpu_custom_call.1} parent=1 // pred_check_branch
      %1769 = sbr.rel (0) target = $region41
    $region40: #{tpu_custom_call.1} parent=1 // pred_region
      _
    $region41: #{tpu_custom_call.1} parent=1 // pred_fallthru
      _
    // Predicated region
    $region42: #{tpu_custom_call.1} parent=1 // pred_check
      _
    $region43: #{tpu_custom_call.1} parent=1 // pred_check_branch
      %1771 = sbr.rel (0) target = $region45
    $region44: #{tpu_custom_call.1} parent=1 // pred_region
      _
    $region45: #{tpu_custom_call.1} parent=1 // pred_fallthru
      _
    %1772 = vsyncpa [#allocation3], 1
    %1773 = vsyncpa [#allocation5], 1

</llo_original>
